<compile_context>
chip_gen: v7x
topology: tpu7x:2x2x1
jax: 0.10.0
libtpu: 0.0.40
codegen_flags: <defaults>
</compile_context>

<pallas_src>
import functools

import numpy as np
import jax
import jax.numpy as jnp
from jax.experimental import pallas as pl
from jax.experimental.pallas import tpu as pltpu


def _phase_plan(K, S, P):
    """Per output phase r in [0,S): list of (kernel tap k, input offset d)."""
    plans, ds = [], []
    for r in range(S):
        c = (r + P) % S                      # smallest valid kernel tap
        f = (r + P - c) // S                 # its input offset
        taps, k, m = [], c, 0
        while k < K:
            taps.append((k, f - m))
            ds.append(f - m)
            k += S
            m += 1
        plans.append(taps)
    d_min = min(ds) if ds else 0
    d_max = max(ds) if ds else 0
    return plans, d_min, d_max


def _fused_weight_maps(C_in, C_out, K, S, plans, d_min, ND):
    """Static numpy gather-index + mask so w_big is built with ONE jnp gather."""
    PC, R = S * S * C_out, ND * ND * C_in
    idx = np.zeros((PC, R), np.int32)
    msk = np.zeros((PC, R), bool)
    co = np.arange(C_out)[:, None]           # rows inside a (C_out, C_in) block
    ci = np.arange(C_in)[None, :]            # cols inside a (C_out, C_in) block
    for rh in range(S):
        for rw in range(S):
            p = rh * S + rw
            for kh, dh in plans[rh]:
                for kw, dw in plans[rw]:
                    t = (dh - d_min) * ND + (dw - d_min)
                    flat = ((ci * C_out + co) * K + kh) * K + kw   # (C_out, C_in)
                    idx[p * C_out:(p + 1) * C_out, t * C_in:(t + 1) * C_in] = flat
                    msk[p * C_out:(p + 1) * C_out, t * C_in:(t + 1) * C_in] = True
    return idx, msk


def _deconv_kernel(x_ref, w_ref, b_ref, o_ref, *, tap_offsets, c_in, tile,
                   static_col):
    # x_ref: (C_in, Lx)        bf16  zero-padded, flattened image (one batch elem)
    # w_ref: (PC, ND*ND*C_in)  bf16  fused (phase, out-chan) weights (resident)
    # b_ref: (PC, 1)           f32   per (phase, out-chan) bias (resident)
    # o_ref: (PC, TILE)        bf16  lane-dense output columns j = qh*Wp + qw
    if static_col:
        col0 = 0                                           # fully static slices
    else:
        col0 = pl.multiple_of(pl.program_id(1) * tile, tile)
    acc = None
    for k, s in enumerate(tap_offsets):                    # static unroll (ND*ND)
        xk = x_ref[:, pl.ds(col0 + s, tile)]               # (C_in, TILE) tap view
        wk = w_ref[:, k * c_in:(k + 1) * c_in]             # (PC, C_in)
        part = jnp.dot(wk, xk, preferred_element_type=jnp.float32)
        acc = part if acc is None else acc + part
    o_ref[...] = jnp.maximum(acc + b_ref[...], 0.0).astype(o_ref.dtype)


@functools.partial(jax.jit, static_argnames=("stride", "padding"))
def deconv_block(x_nchw, weight, bias, *, stride, padding):
    """ConvTranspose2d(stride, padding) + ReLU (PyTorch semantics).

    x_nchw : (N, C_in, H, W)
    weight : (C_in, C_out, K, K)   PyTorch ConvTranspose2d weight layout
    bias   : (C_out,)
    returns: (N, C_out, H_out, W_out), H_out = (H-1)*S - 2*P + K
    """
    N, C_in, H, W = x_nchw.shape
    _, C_out, K, _ = weight.shape
    S, P = stride, padding
    H_out = (H - 1) * S - 2 * P + K
    W_out = (W - 1) * S - 2 * P + K
    assert H_out > 0 and W_out > 0, "invalid output size"

    plans, d_min, d_max = _phase_plan(K, S, P)
    ND = d_max - d_min + 1                   # union of per-dim input offsets
    Qh = -(-H_out // S)                      # per-phase output rows (ceil)
    Qw = -(-W_out // S)
    R = ND * ND * C_in
    PC = S * S * C_out

    pad_lo = max(0, -d_min)
    pad_hi_h = max(0, (Qh - 1) + d_max - (H - 1))
    pad_hi_w = max(0, (Qw - 1) + d_max - (W - 1))
    Hp = pad_lo + H + pad_hi_h
    Wp = pad_lo + W + pad_hi_w

    # ---- column / tile geometry (lane-dense, multiple of 128) --------------
    CT = Qh * Wp                             # kernel columns per image
    CT128 = ((CT + 127) // 128) * 128
    TILE_CAP = 2048
    # keep >= 2 total parallel grid steps even when N == 1 (v7x: 2 TCs/chip)
    min_tiles = 1 if N >= 2 else min(2, CT128 // 128)
    n_tiles = max(min_tiles, -(-CT128 // TILE_CAP), 1)
    TILE = ((-(-CT128 // n_tiles)) + 127) // 128 * 128
    CT_grid = TILE * n_tiles

    # tap flat offsets into the padded, flattened image; column j = qh*Wp + qw
    # needs x_flat[:, j + s(dh,dw)] with s = (pad_lo+dh)*Wp + (pad_lo+dw)
    tap_offsets = tuple((pad_lo + dh) * Wp + (pad_lo + dw)
                        for dh in range(d_min, d_max + 1)
                        for dw in range(d_min, d_max + 1))
    s_max = (pad_lo + d_max) * Wp + (pad_lo + d_max)
    Lx = max(CT_grid + s_max, Hp * Wp)       # keep all tap slices in-bounds

    # ---- glue (plain JAX): zero-pad + flatten, ~1x input bytes -------------
    xb = x_nchw.astype(jnp.bfloat16)
    x_pad = jnp.pad(xb, ((0, 0), (0, 0), (pad_lo, pad_hi_h), (pad_lo, pad_hi_w)))
    x_flat = x_pad.reshape(N, C_in, Hp * Wp)
    x_flat = jnp.pad(x_flat, ((0, 0), (0, 0), (0, Lx - Hp * Wp)))

    # Fused weight via a single gather: w_big[(rh*S+rw)*C_out+co, t*C_in+ci]
    idx, msk = _fused_weight_maps(C_in, C_out, K, S, plans, d_min, ND)
    w_big = jnp.where(jnp.asarray(msk),
                      weight.reshape(-1)[jnp.asarray(idx)],
                      jnp.float32(0)).astype(jnp.bfloat16)
    b_big = jnp.tile(bias.astype(jnp.float32), S * S).reshape(PC, 1)

    # ---- Pallas kernel: all the FLOPs --------------------------------------
    kernel = functools.partial(_deconv_kernel, tap_offsets=tap_offsets,
                               c_in=C_in, tile=TILE,
                               static_col=(n_tiles == 1))
    out = pl.pallas_call(
        kernel,
        out_shape=jax.ShapeDtypeStruct((N, PC, CT_grid), jnp.bfloat16),
        grid_spec=pl.GridSpec(
            grid=(N, n_tiles),
            in_specs=[
                # whole per-image flat input, DMA'd once per batch element
                pl.BlockSpec((pl.Squeezed(), C_in, Lx), lambda n, t: (n, 0, 0)),
                pl.BlockSpec((PC, R), lambda n, t: (0, 0)),   # resident weights
                pl.BlockSpec((PC, 1), lambda n, t: (0, 0)),   # resident bias
            ],
            out_specs=pl.BlockSpec((pl.Squeezed(), PC, TILE),
                                   lambda n, t: (n, 0, t)),
        ),
        compiler_params=pltpu.CompilerParams(
            dimension_semantics=("parallel", "parallel"),
            vmem_limit_bytes=32 * 1024 * 1024),
    )(x_flat, w_big, b_big)

    # ---- pixel-shuffle phases back into NCHW (pure data movement) ----------
    # TODO(synk): fuse this pixel-shuffle writeback into the kernel epilogue
    # (per-phase strided stores) to drop the remaining XLA transpose round trip.
    out = out[:, :, :CT].reshape(N, S, S, C_out, Qh, Wp)[..., :Qw]
    out = jnp.transpose(out, (0, 3, 4, 1, 5, 2)).reshape(N, C_out, Qh * S, Qw * S)
    return out[:, :, :H_out, :W_out].astype(jnp.float32)


if __name__ == "__main__":
    # DeconvBlock(in_channels=4, out_channels=8, kernel_size=4, stride=2, padding=1)
    N, C_in, C_out, H, W = 2, 4, 8, 16, 16
    K, S, P = 4, 2, 1

    key = jax.random.PRNGKey(0)
    k1, k2, k3 = jax.random.split(key, 3)
    x = jax.random.normal(k1, (N, C_in, H, W), jnp.float32)
    bound = (1.0 / (C_in * K * K)) ** 0.5    # PyTorch-style init bound
    weight = jax.random.uniform(k2, (C_in, C_out, K, K), jnp.float32, -bound, bound)
    bias = jax.random.uniform(k3, (C_out,), jnp.float32, -bound, bound)

    out = deconv_block(x, weight, bias, stride=S, padding=P)
    out = jax.block_until_ready(out)

    # Pure-JAX f32 reference: lhs-dilated conv with the spatially flipped kernel.
    x_nhwc = jnp.transpose(x, (0, 2, 3, 1))
    g = jnp.transpose(weight[:, :, ::-1, ::-1], (2, 3, 0, 1))    # (K,K,C_in,C_out)
    pp = K - 1 - P
    ref = jax.lax.conv_general_dilated(
        x_nhwc, g, window_strides=(1, 1),
        padding=[(pp, pp), (pp, pp)], lhs_dilation=(S, S),
        dimension_numbers=("NHWC", "HWIO", "NHWC"))
    ref = jnp.maximum(ref + bias[None, None, None, :], 0.0)
    ref = jnp.transpose(ref, (0, 3, 1, 2))

    H_out = (H - 1) * S - 2 * P + K
    W_out = (W - 1) * S - 2 * P + K
    assert out.shape == (N, C_out, H_out, W_out), out.shape
    # bf16 matmul inputs / bf16 kernel store with f32 accumulation -> relaxed tol.
    assert jnp.allclose(out, ref, atol=2e-2, rtol=2e-2), (
        float(jnp.max(jnp.abs(out - ref))))
    print("KERNEL_OK")
</pallas_src>

<mosaic_0001>
module attributes {stable_mosaic.version = 11 : i64} {
  func.func @_deconv_kernel(%arg0: i32, %arg1: i32, %arg2: memref<1x4x422xbf16, #tpu.memory_space<vmem>>, %arg3: memref<32x36xbf16, #tpu.memory_space<vmem>>, %arg4: memref<32x1xf32, #tpu.memory_space<vmem>>, %arg5: memref<1x32x384xbf16, #tpu.memory_space<vmem>>) attributes {dimension_semantics = [#tpu.dimension_semantics<parallel>, #tpu.dimension_semantics<parallel>], iteration_bounds = array<i64: 2, 1>, scalar_prefetch = 0 : i64, scratch_operands = 0 : i64, tpu.core_type = #tpu.core_type<tc>, window_params = [{transform_indices = @transform_0, window_bounds = array<i64: 1, 4, 422>}, {pipeline_mode = #tpu.pipeline_mode<synchronous>, transform_indices = @transform_1, window_bounds = array<i64: 32, 36>}, {pipeline_mode = #tpu.pipeline_mode<synchronous>, transform_indices = @transform_2, window_bounds = array<i64: 32, 1>}, {transform_indices = @transform_3, window_bounds = array<i64: 1, 32, 384>}]} {
    %c0 = arith.constant 0 : index
    %c0_0 = arith.constant 0 : index
    %c0_1 = arith.constant 0 : index
    %0 = vector.load %arg2[%c0, %c0_0, %c0_1] : memref<1x4x422xbf16, #tpu.memory_space<vmem>>, vector<1x4x384xbf16>
    %1 = vector.shape_cast %0 : vector<1x4x384xbf16> to vector<4x384xbf16>
    %c0_2 = arith.constant 0 : index
    %c0_3 = arith.constant 0 : index
    %2 = vector.load %arg3[%c0_2, %c0_3] : memref<32x36xbf16, #tpu.memory_space<vmem>>, vector<32x4xbf16>
    %cst = arith.constant dense<0.000000e+00> : vector<32x384xf32>
    %3 = tpu.matmul %2, %1, %cst {dimension_numbers = #tpu.dot_dimension_numbers<[1], [0], [0], [1], [0, 0, 1, 1], [], []>} : vector<32x4xbf16>, vector<4x384xbf16>, vector<32x384xf32> -> vector<32x384xf32>
    %c0_4 = arith.constant 0 : index
    %c0_5 = arith.constant 0 : index
    %c1 = arith.constant 1 : index
    %4 = vector.load %arg2[%c0_4, %c0_5, %c1] : memref<1x4x422xbf16, #tpu.memory_space<vmem>>, vector<1x4x384xbf16>
    %5 = vector.shape_cast %4 : vector<1x4x384xbf16> to vector<4x384xbf16>
    %c0_6 = arith.constant 0 : index
    %c4 = arith.constant 4 : index
    %6 = vector.load %arg3[%c0_6, %c4] : memref<32x36xbf16, #tpu.memory_space<vmem>>, vector<32x4xbf16>
    %cst_7 = arith.constant dense<0.000000e+00> : vector<32x384xf32>
    %7 = tpu.matmul %6, %5, %cst_7 {dimension_numbers = #tpu.dot_dimension_numbers<[1], [0], [0], [1], [0, 0, 1, 1], [], []>} : vector<32x4xbf16>, vector<4x384xbf16>, vector<32x384xf32> -> vector<32x384xf32>
    %8 = arith.addf %3, %7 : vector<32x384xf32>
    %c0_8 = arith.constant 0 : index
    %c0_9 = arith.constant 0 : index
    %c2 = arith.constant 2 : index
    %9 = vector.load %arg2[%c0_8, %c0_9, %c2] : memref<1x4x422xbf16, #tpu.memory_space<vmem>>, vector<1x4x384xbf16>
    %10 = vector.shape_cast %9 : vector<1x4x384xbf16> to vector<4x384xbf16>
    %c0_10 = arith.constant 0 : index
    %c8 = arith.constant 8 : index
    %11 = vector.load %arg3[%c0_10, %c8] : memref<32x36xbf16, #tpu.memory_space<vmem>>, vector<32x4xbf16>
    %cst_11 = arith.constant dense<0.000000e+00> : vector<32x384xf32>
    %12 = tpu.matmul %11, %10, %cst_11 {dimension_numbers = #tpu.dot_dimension_numbers<[1], [0], [0], [1], [0, 0, 1, 1], [], []>} : vector<32x4xbf16>, vector<4x384xbf16>, vector<32x384xf32> -> vector<32x384xf32>
    %13 = arith.addf %8, %12 : vector<32x384xf32>
    %c0_12 = arith.constant 0 : index
    %c0_13 = arith.constant 0 : index
    %c18 = arith.constant 18 : index
    %14 = vector.load %arg2[%c0_12, %c0_13, %c18] : memref<1x4x422xbf16, #tpu.memory_space<vmem>>, vector<1x4x384xbf16>
    %15 = vector.shape_cast %14 : vector<1x4x384xbf16> to vector<4x384xbf16>
    %c0_14 = arith.constant 0 : index
    %c12 = arith.constant 12 : index
    %16 = vector.load %arg3[%c0_14, %c12] : memref<32x36xbf16, #tpu.memory_space<vmem>>, vector<32x4xbf16>
    %cst_15 = arith.constant dense<0.000000e+00> : vector<32x384xf32>
    %17 = tpu.matmul %16, %15, %cst_15 {dimension_numbers = #tpu.dot_dimension_numbers<[1], [0], [0], [1], [0, 0, 1, 1], [], []>} : vector<32x4xbf16>, vector<4x384xbf16>, vector<32x384xf32> -> vector<32x384xf32>
    %18 = arith.addf %13, %17 : vector<32x384xf32>
    %c0_16 = arith.constant 0 : index
    %c0_17 = arith.constant 0 : index
    %c19 = arith.constant 19 : index
    %19 = vector.load %arg2[%c0_16, %c0_17, %c19] : memref<1x4x422xbf16, #tpu.memory_space<vmem>>, vector<1x4x384xbf16>
    %20 = vector.shape_cast %19 : vector<1x4x384xbf16> to vector<4x384xbf16>
    %c0_18 = arith.constant 0 : index
    %c16 = arith.constant 16 : index
    %21 = vector.load %arg3[%c0_18, %c16] : memref<32x36xbf16, #tpu.memory_space<vmem>>, vector<32x4xbf16>
    %cst_19 = arith.constant dense<0.000000e+00> : vector<32x384xf32>
    %22 = tpu.matmul %21, %20, %cst_19 {dimension_numbers = #tpu.dot_dimension_numbers<[1], [0], [0], [1], [0, 0, 1, 1], [], []>} : vector<32x4xbf16>, vector<4x384xbf16>, vector<32x384xf32> -> vector<32x384xf32>
    %23 = arith.addf %18, %22 : vector<32x384xf32>
    %c0_20 = arith.constant 0 : index
    %c0_21 = arith.constant 0 : index
    %c20 = arith.constant 20 : index
    %24 = vector.load %arg2[%c0_20, %c0_21, %c20] : memref<1x4x422xbf16, #tpu.memory_space<vmem>>, vector<1x4x384xbf16>
    %25 = vector.shape_cast %24 : vector<1x4x384xbf16> to vector<4x384xbf16>
    %c0_22 = arith.constant 0 : index
    %c20_23 = arith.constant 20 : index
    %26 = vector.load %arg3[%c0_22, %c20_23] : memref<32x36xbf16, #tpu.memory_space<vmem>>, vector<32x4xbf16>
    %cst_24 = arith.constant dense<0.000000e+00> : vector<32x384xf32>
    %27 = tpu.matmul %26, %25, %cst_24 {dimension_numbers = #tpu.dot_dimension_numbers<[1], [0], [0], [1], [0, 0, 1, 1], [], []>} : vector<32x4xbf16>, vector<4x384xbf16>, vector<32x384xf32> -> vector<32x384xf32>
    %28 = arith.addf %23, %27 : vector<32x384xf32>
    %c0_25 = arith.constant 0 : index
    %c0_26 = arith.constant 0 : index
    %c36 = arith.constant 36 : index
    %29 = vector.load %arg2[%c0_25, %c0_26, %c36] : memref<1x4x422xbf16, #tpu.memory_space<vmem>>, vector<1x4x384xbf16>
    %30 = vector.shape_cast %29 : vector<1x4x384xbf16> to vector<4x384xbf16>
    %c0_27 = arith.constant 0 : index
    %c24 = arith.constant 24 : index
    %31 = vector.load %arg3[%c0_27, %c24] : memref<32x36xbf16, #tpu.memory_space<vmem>>, vector<32x4xbf16>
    %cst_28 = arith.constant dense<0.000000e+00> : vector<32x384xf32>
    %32 = tpu.matmul %31, %30, %cst_28 {dimension_numbers = #tpu.dot_dimension_numbers<[1], [0], [0], [1], [0, 0, 1, 1], [], []>} : vector<32x4xbf16>, vector<4x384xbf16>, vector<32x384xf32> -> vector<32x384xf32>
    %33 = arith.addf %28, %32 : vector<32x384xf32>
    %c0_29 = arith.constant 0 : index
    %c0_30 = arith.constant 0 : index
    %c37 = arith.constant 37 : index
    %34 = vector.load %arg2[%c0_29, %c0_30, %c37] : memref<1x4x422xbf16, #tpu.memory_space<vmem>>, vector<1x4x384xbf16>
    %35 = vector.shape_cast %34 : vector<1x4x384xbf16> to vector<4x384xbf16>
    %c0_31 = arith.constant 0 : index
    %c28 = arith.constant 28 : index
    %36 = vector.load %arg3[%c0_31, %c28] : memref<32x36xbf16, #tpu.memory_space<vmem>>, vector<32x4xbf16>
    %cst_32 = arith.constant dense<0.000000e+00> : vector<32x384xf32>
    %37 = tpu.matmul %36, %35, %cst_32 {dimension_numbers = #tpu.dot_dimension_numbers<[1], [0], [0], [1], [0, 0, 1, 1], [], []>} : vector<32x4xbf16>, vector<4x384xbf16>, vector<32x384xf32> -> vector<32x384xf32>
    %38 = arith.addf %33, %37 : vector<32x384xf32>
    %c0_33 = arith.constant 0 : index
    %c0_34 = arith.constant 0 : index
    %c38 = arith.constant 38 : index
    %39 = vector.load %arg2[%c0_33, %c0_34, %c38] : memref<1x4x422xbf16, #tpu.memory_space<vmem>>, vector<1x4x384xbf16>
    %40 = vector.shape_cast %39 : vector<1x4x384xbf16> to vector<4x384xbf16>
    %c0_35 = arith.constant 0 : index
    %c32 = arith.constant 32 : index
    %41 = vector.load %arg3[%c0_35, %c32] : memref<32x36xbf16, #tpu.memory_space<vmem>>, vector<32x4xbf16>
    %cst_36 = arith.constant dense<0.000000e+00> : vector<32x384xf32>
    %42 = tpu.matmul %41, %40, %cst_36 {dimension_numbers = #tpu.dot_dimension_numbers<[1], [0], [0], [1], [0, 0, 1, 1], [], []>} : vector<32x4xbf16>, vector<4x384xbf16>, vector<32x384xf32> -> vector<32x384xf32>
    %43 = arith.addf %38, %42 : vector<32x384xf32>
    %c0_37 = arith.constant 0 : index
    %c0_38 = arith.constant 0 : index
    %44 = vector.load %arg4[%c0_37, %c0_38] : memref<32x1xf32, #tpu.memory_space<vmem>>, vector<32x1xf32>
    %45 = vector.broadcast %44 : vector<32x1xf32> to vector<32x384xf32>
    %46 = arith.addf %43, %45 : vector<32x384xf32>
    %cst_39 = arith.constant 0.000000e+00 : f32
    %47 = vector.broadcast %cst_39 : f32 to vector<32x384xf32>
    %48 = arith.maximumf %46, %47 : vector<32x384xf32>
    %49 = arith.truncf %48 : vector<32x384xf32> to vector<32x384xbf16>
    %c0_40 = arith.constant 0 : index
    %c0_41 = arith.constant 0 : index
    %c0_42 = arith.constant 0 : index
    %50 = vector.load %arg5[%c0_40, %c0_41, %c0_42] : memref<1x32x384xbf16, #tpu.memory_space<vmem>>, vector<1x32x384xbf16>
    %51 = vector.shape_cast %50 : vector<1x32x384xbf16> to vector<32x384xbf16>
    %52 = vector.shape_cast %49 : vector<32x384xbf16> to vector<1x32x384xbf16>
    tpu.vector_store %arg5[%c0_40, %c0_41, %c0_42], %52 {strides = array<i32>} : memref<1x32x384xbf16, #tpu.memory_space<vmem>>, vector<1x32x384xbf16>,
    return
  }
  func.func @transform_0(%arg0: i32, %arg1: i32) -> (i32, i32, i32) {
    %c0_i32 = arith.constant 0 : i32
    %c0_i32_0 = arith.constant 0 : i32
    %c0_i32_1 = arith.constant 0 : i32
    return %arg0, %c0_i32, %c0_i32_0 : i32, i32, i32
  }
  func.func @transform_1(%arg0: i32, %arg1: i32) -> (i32, i32) {
    %c0_i32 = arith.constant 0 : i32
    %c0_i32_0 = arith.constant 0 : i32
    %c0_i32_1 = arith.constant 0 : i32
    return %c0_i32, %c0_i32_0 : i32, i32
  }
  func.func @transform_2(%arg0: i32, %arg1: i32) -> (i32, i32) {
    %c0_i32 = arith.constant 0 : i32
    %c0_i32_0 = arith.constant 0 : i32
    %c0_i32_1 = arith.constant 0 : i32
    return %c0_i32, %c0_i32_0 : i32, i32
  }
  func.func @transform_3(%arg0: i32, %arg1: i32) -> (i32, i32, i32) {
    %c0_i32 = arith.constant 0 : i32
    %c0_i32_0 = arith.constant 0 : i32
    return %arg0, %c0_i32, %arg1 : i32, i32, i32
  }
}

</mosaic_0001>

<llo_original>
// kernel: tile.8
$region0: #{tile.8}
  #allocation0 [shape = 's32[1]{0}', space=sflag, size = 0x4, scoped, tag = 'scoped memory for tile.8']
  %s0 = inlined_call_operand.vmem [shape: f32[8], index: 0, kind: input, shape index: {}]
  %s1 = inlined_call_operand.vmem [shape: f32[4,8], index: 1, kind: output, shape index: {}]
  // Predicated region
  $region2: #{tile.8} parent=0 // pred_check
    _
  $region3: #{tile.8} parent=0 // pred_check_branch
    %3 = sbr.rel (0) target = $region5
  $region4: #{tile.8} parent=0 // pred_region
    _
  $region5: #{tile.8} parent=0 // pred_fallthru
    _
  %v4 = vld [vmem:[%s0] ss:$0 sm:$0xff]
  %5 = vst [vmem:[%s1] sm:$0xf] %v4

// kernel: tile.0
$region0: #{tile.0}
  %s0 = inlined_call_operand.vmem [shape: f32[4,8], index: 0, kind: input, shape index: {}]
  %s1 = inlined_call_operand.vmem [shape: f32[32,1], index: 1, kind: output, shape index: {}]
  $region1: #{tile.0} parent=0
    #allocation0 [shape = 'u8[4096]{0}', space=vmem, size = 0x1000, scoped, tag = 'scoped mem for input reshape']
    %s3 = sshllo.u32 0, 4
    %v4 = vld [vmem:[%s0] sm:%s3]
    %5 = vst [vmem:[#allocation0] sm:%s3] %v4
    %v6 = vld [vmem:[#allocation0] sm:$0xf]
    %vm7 = vcmask 7168
    %8 = vst.msk [vmem:[%s1] ss:$8 sm:$0xf] %vm7, %v6
    %v9 = vld [vmem:[#allocation0] sm:$0xf]
    %10 = vrot.lane.b32.xlu0 %v9, 127
    %v11 = vpop.permute.xlu0 %10
    %vm12 = vcmask 7168
    %s13 = scalar_lea.vmem %s1, 1
    %14 = vst.msk [vmem:[%s13] ss:$8 sm:$0xf] %vm12, %v11
    %v15 = vld [vmem:[#allocation0] sm:$0xf]
    %16 = vrot.lane.b32.xlu0 %v15, 126
    %v17 = vpop.permute.xlu0 %16
    %vm18 = vcmask 7168
    %s19 = scalar_lea.vmem %s1, 2
    %20 = vst.msk [vmem:[%s19] ss:$8 sm:$0xf] %vm18, %v17
    %v21 = vld [vmem:[#allocation0] sm:$0xf]
    %22 = vrot.lane.b32.xlu0 %v21, 125
    %v23 = vpop.permute.xlu0 %22
    %vm24 = vcmask 7168
    %s25 = scalar_lea.vmem %s1, 3
    %26 = vst.msk [vmem:[%s25] ss:$8 sm:$0xf] %vm24, %v23
    %v27 = vld [vmem:[#allocation0] sm:$0xf]
    %28 = vrot.lane.b32.xlu0 %v27, 124
    %v29 = vpop.permute.xlu0 %28
    %vm30 = vcmask 7168
    %s31 = scalar_lea.vmem %s1, 4
    %32 = vst.msk [vmem:[%s31] ss:$8 sm:$0xf] %vm30, %v29
    %v33 = vld [vmem:[#allocation0] sm:$0xf]
    %34 = vrot.lane.b32.xlu0 %v33, 123
    %v35 = vpop.permute.xlu0 %34
    %vm36 = vcmask 7168
    %s37 = scalar_lea.vmem %s1, 5
    %38 = vst.msk [vmem:[%s37] ss:$8 sm:$0xf] %vm36, %v35
    %v39 = vld [vmem:[#allocation0] sm:$0xf]
    %40 = vrot.lane.b32.xlu0 %v39, 122
    %v41 = vpop.permute.xlu0 %40
    %vm42 = vcmask 7168
    %s43 = scalar_lea.vmem %s1, 6
    %44 = vst.msk [vmem:[%s43] ss:$8 sm:$0xf] %vm42, %v41
    %v45 = vld [vmem:[#allocation0] sm:$0xf]
    %46 = vrot.lane.b32.xlu0 %v45, 121
    %v47 = vpop.permute.xlu0 %46
    %vm48 = vcmask 7168
    %s49 = scalar_lea.vmem %s1, 7
    %50 = vst.msk [vmem:[%s49] ss:$8 sm:$0xf] %vm48, %v47

// kernel: deconv_block.1
$region0: #{deconv_block.1}
  #allocation0 [shape = 'u32[]', space=smem, size = 0x4, offset = 0x4, fixed_abs, tag = 'smem constant byte address 0x4 - core index']
  #allocation1 [shape = 'u32[144,128]{1,0:T(1,128)}', space=vmem, size = 0x12000, scoped, tag = 'internal scratch']
  %s0 = inlined_call_operand.vmem [shape: bf16[2,4,422], index: 0, kind: input, shape index: {}]
  %s1 = inlined_call_operand.vmem [shape: bf16[32,36], index: 1, kind: input, shape index: {}]
  %s2 = inlined_call_operand.vmem [shape: f32[32,1], index: 2, kind: input, shape index: {}]
  %s3 = inlined_call_operand.vmem [shape: bf16[2,32,384], index: 3, kind: output, shape index: {}]
  %s4 = sld [smem:[#allocation0]]
  $region45: #{deconv_block.1} parent=0
    _
  %s6 = ssub.s32 1, %s4
  %s7 = scalar_select 0, %s6, %s4
  loop: start=0, step=1, limit=4
  $region2: #{deconv_block.1} parent=0 // loop_pre_header
    _
  $region3: #{deconv_block.1} parent=0 // loop_header
    %s9 = sphi 0, %s13
    %p10 = scmp.ge.s32.totalorder %s9, 4
    %s16 = sphi 0, %s28
    %s17 = sphi 0, %s24
    %s18 = sphi 0, %s16
    %s19 = sphi 0, %s17
    %s20 = sphi 0, %s18
    %s21 = sphi 0, %s19
    %s31 = sphi 0, %s33
    %s34 = sphi 0, %s31
    %s35 = sphi 0, %s34
    %s51 = sphi 0, %s35
    %s55 = sphi 0, %s55
    %s57 = sphi 0, %s55
    %s58 = sphi 0, %s57
    %s72 = sphi 0, %s58
    %s76 = sphi 0, %s76
    %s78 = sphi 0, %s76
    %s79 = sphi 0, %s78
    %s93 = sphi 0, %s79
    %s101 = sphi 0, %s103
    %s104 = sphi 0, %s101
    %s105 = sphi 0, %s104
    %s121 = sphi 0, %s105
  $region4: #{deconv_block.1} parent=0 // loop_header_branch
    %12 = sbr.rel (%p10) target = $region8
  $region5: #{deconv_block.1} parent=0 // loop_body
    %s14 = ssub.s32 %s9, 1
    %s15 = ssub.s32 %s9, 2
    %s22 = sadd.s32 1, %s17
    %p23 = scmp.ge.s32.totalorder %s22, 1
    %s24 = scalar_select %p23, 0, %s22
    %s25 = sadd.s32 1, %s16
    %s26 = scalar_select %p23, %s25, %s16
    %p27 = scmp.ge.s32.totalorder %s26, 2
    %s28 = scalar_select %p27, 0, %s26
    %s29 = ssub.s32 %s16, %s28
    %p30 = scmp.eq.s32.totalorder %s29, 0
    %s32 = sadd.s32 %s31, 1
    %s33 = scalar_select %p30, %s31, %s32
    %p36 = pneg %p30
    %p37 = scmp.eq.s32.totalorder %s9, 1
    %p38 = por %p36, %p37
    %p39 = scmp.ne.s32.totalorder %s31, %s34
    %p40 = scmp.eq.s32.totalorder %s9, 0
    %p41 = por %p39, %p40
    %p42 = scmp.ne.s32.totalorder %s31, %s34
    %p43 = scmp.eq.s32.totalorder %s14, 1
    %p44 = por %p42, %p43
    %p45 = scmp.ne.s32.totalorder %s34, %s35
    %p46 = scmp.eq.s32.totalorder %s14, 0
    %p47 = por %p45, %p46
    %p48 = scmp.ne.s32.totalorder %s34, %s35
    %p49 = scmp.eq.s32.totalorder %s15, 1
    %p50 = por %p48, %p49
    %p52 = scmp.ne.s32.totalorder %s35, %s51
    %p53 = scmp.eq.s32.totalorder %s15, 0
    %p54 = por %p52, %p53
    %s56 = sadd.s32 %s55, 1
    %p59 = scmp.eq.s32.totalorder %s9, 1
    %p60 = scmp.ne.s32.totalorder %s55, %s57
    %p61 = scmp.eq.s32.totalorder %s9, 0
    %p62 = por %p60, %p61
    %p63 = scmp.ne.s32.totalorder %s55, %s57
    %p64 = scmp.eq.s32.totalorder %s14, 1
    %p65 = por %p63, %p64
    %p66 = scmp.ne.s32.totalorder %s57, %s58
    %p67 = scmp.eq.s32.totalorder %s14, 0
    %p68 = por %p66, %p67
    %p69 = scmp.ne.s32.totalorder %s57, %s58
    %p70 = scmp.eq.s32.totalorder %s15, 1
    %p71 = por %p69, %p70
    %p73 = scmp.ne.s32.totalorder %s58, %s72
    %p74 = scmp.eq.s32.totalorder %s15, 0
    %p75 = por %p73, %p74
    %s77 = sadd.s32 %s76, 1
    %p80 = scmp.eq.s32.totalorder %s9, 1
    %p81 = scmp.ne.s32.totalorder %s76, %s78
    %p82 = scmp.eq.s32.totalorder %s9, 0
    %p83 = por %p81, %p82
    %p84 = scmp.ne.s32.totalorder %s76, %s78
    %p85 = scmp.eq.s32.totalorder %s14, 1
    %p86 = por %p84, %p85
    %p87 = scmp.ne.s32.totalorder %s78, %s79
    %p88 = scmp.eq.s32.totalorder %s14, 0
    %p89 = por %p87, %p88
    %p90 = scmp.ne.s32.totalorder %s78, %s79
    %p91 = scmp.eq.s32.totalorder %s15, 1
    %p92 = por %p90, %p91
    %p94 = scmp.ne.s32.totalorder %s79, %s93
    %p95 = scmp.eq.s32.totalorder %s15, 0
    %p96 = por %p94, %p95
    %s97 = ssub.s32 %s16, %s28
    %s98 = ssub.s32 %s17, %s24
    %s99 = sor.u32 %s97, %s98
    %p100 = scmp.eq.s32.totalorder %s99, 0
    %s102 = sadd.s32 %s101, 1
    %s103 = scalar_select %p100, %s101, %s102
    %p106 = pneg %p100
    %p107 = scmp.eq.s32.totalorder %s9, 1
    %p108 = por %p106, %p107
    %p109 = scmp.ne.s32.totalorder %s101, %s104
    %p110 = scmp.eq.s32.totalorder %s9, 0
    %p111 = por %p109, %p110
    %p112 = scmp.ne.s32.totalorder %s101, %s104
    %p113 = scmp.eq.s32.totalorder %s14, 1
    %p114 = por %p112, %p113
    %p115 = scmp.ne.s32.totalorder %s104, %s105
    %p116 = scmp.eq.s32.totalorder %s14, 0
    %p117 = por %p115, %p116
    %p118 = scmp.ne.s32.totalorder %s104, %s105
    %p119 = scmp.eq.s32.totalorder %s15, 1
    %p120 = por %p118, %p119
    %p122 = scmp.ne.s32.totalorder %s105, %s121
    %p123 = scmp.eq.s32.totalorder %s15, 0
    %p124 = por %p122, %p123
    %p125 = scmp.le.s32.totalorder 1, %s9
    %p126 = scmp.lt.s32.totalorder %s9, 3
    %p127 = pnand %p125, %p126
    %p128 = pneg %p127
    // Predicated region
    $region9: #{deconv_block.1} parent=5 // pred_check
      _
    $region10: #{deconv_block.1} parent=5 // pred_check_branch
      %130 = sbr.rel (%p127) target = $region12
    $region11: #{deconv_block.1} parent=5 // pred_region
      %s131 = ssub.s32 %s9, 1
      // Predicated region
      $region13: #{deconv_block.1} parent=11 // pred_check
        %p132 = pneg %p68
      $region14: #{deconv_block.1} parent=11 // pred_check_branch
        %134 = sbr.rel (%p132) target = $region16
      $region15: #{deconv_block.1} parent=11 // pred_region
        _
      $region16: #{deconv_block.1} parent=11 // pred_fallthru
        _
      // Predicated region
      $region17: #{deconv_block.1} parent=11 // pred_check
        %p135 = pneg %p89
      $region18: #{deconv_block.1} parent=11 // pred_check_branch
        %137 = sbr.rel (%p135) target = $region20
      $region19: #{deconv_block.1} parent=11 // pred_region
        _
      $region20: #{deconv_block.1} parent=11 // pred_fallthru
        _
    $region12: #{deconv_block.1} parent=5 // pred_fallthru
      _
    %p138 = scmp.lt.s32.totalorder %s9, 2
    // Predicated region
    $region21: #{deconv_block.1} parent=5 // pred_check
      %p139 = pneg %p138
    $region22: #{deconv_block.1} parent=5 // pred_check_branch
      %141 = sbr.rel (%p139) target = $region24
    $region23: #{deconv_block.1} parent=5 // pred_region
      // Predicated region
      $region25: #{deconv_block.1} parent=23 // pred_check
        %p142 = pneg %p41
      $region26: #{deconv_block.1} parent=23 // pred_check_branch
        %144 = sbr.rel (%p142) target = $region28
      $region27: #{deconv_block.1} parent=23 // pred_region
        %p145 = scmp.lt.s32.totalorder %s16, 1
        %s146 = scalar_select %p145, %s16, 1
        %s147 = smul.addr %s146, 4
        %s148 = smul.addr %s147, 2
        %s149 = scalar_lea.vmem %s0, %s148
      $region28: #{deconv_block.1} parent=23 // pred_fallthru
        _
    $region24: #{deconv_block.1} parent=5 // pred_fallthru
      _
    %p150 = scmp.le.s32.totalorder 1, %s9
    %p151 = scmp.lt.s32.totalorder %s9, 3
    %p152 = pnand %p150, %p151
    %p153 = pneg %p152
    // Predicated region
    $region29: #{deconv_block.1} parent=5 // pred_check
      _
    $region30: #{deconv_block.1} parent=5 // pred_check_branch
      %155 = sbr.rel (%p152) target = $region32
    $region31: #{deconv_block.1} parent=5 // pred_region
      %s156 = ssub.s32 %s9, 1
      %p157 = scmp.lt.s32.totalorder %s18, 1
      %s158 = scalar_select %p157, %s18, 1
      %s159 = smul.addr %s158, 4
      %s160 = smul.addr %s159, 2
      %s161 = scalar_lea.vmem %s0, %s160
      %p162 = pneg %p47
      %p163 = pneg %p44
      %p164 = pneg %p68
      %p165 = pneg %p65
      %p166 = pneg %p89
      %p167 = pneg %p86
      %p168 = pneg %p117
      %p169 = pneg %p114
      %s170 = smul.u32 3, %s19
      %p171 = scmp.lt.s32.totalorder %s18, 1
      %s172 = scalar_select %p171, %s18, 1
      %p173 = scmp.lt.s32.totalorder %s170, 2
      %s174 = scalar_select %p173, %s170, 2
      %s175 = smul.addr %s172, 12
      %s176 = sadd.s32 %s174, %s175
      %s177 = smul.addr %s176, 4
      %s178 = scalar_lea.vmem %s3, %s177
      %p179 = scmp.lt.s32.totalorder %s18, 1
      %s180 = scalar_select %p179, %s18, 1
      %s181 = smul.addr %s180, 4
      %s182 = smul.addr %s181, 2
      %s183 = scalar_lea.vmem %s0, %s182
      %s184 = smul.u32 3, %s19
      %p185 = scmp.lt.s32.totalorder %s18, 1
      %s186 = scalar_select %p185, %s18, 1
      %p187 = scmp.lt.s32.totalorder %s184, 2
      %s188 = scalar_select %p187, %s184, 2
      %s189 = smul.addr %s186, 12
      %s190 = sadd.s32 %s188, %s189
      %s191 = smul.addr %s190, 4
      %s192 = scalar_lea.vmem %s3, %s191
      %s193 = smul.u32 3, %s19
      %v195 = vld [vmem:[%s183] sm:$0x3f]
      %v196 = vld [vmem:[%s1] sm:$0xf]
      %v197 = vld [vmem:[%s1 + $0x4] sm:$0xf]
      %v198 = vld [vmem:[%s1 + $0x8] sm:$0xf]
      %v199 = vld [vmem:[%s1 + $0xc] sm:$0xf]
      %v200 = vld [vmem:[%s183] sm:$0xff]
      %v205 = vunpack.c.l.b16 %v196
      %v206 = vunpack.c.l.b16 %v197
      %v207 = vunpack.c.l.b16 %v198
      %v208 = vunpack.c.l.b16 %v199
      %v209 = vpack.c.b16 %v206, %v205
      %v210 = vpack.c.b16 %v208, %v207
      %211 = vrot.lane.b32.xlu0 %v209, 124
      %v212 = vpop.permute.xlu0 %211
      %213 = vrot.lane.b32.xlu0 %v210, 124
      %v214 = vpop.permute.xlu0 %213
      %v216 = vcombine.high %v200, %v200
      %v218 = vunpack.c.l.s4 1983009808
      %v219 = vunpack.c.0.s8 %v218
      %v220 = vlaneseq
      %v221 = vshrl.u32 %v220, 7
      %v222 = vsub.s32 %v219, %v221
      %v223 = vrot.slane %v200, %v222
      %v225 = vunpack.c.l.s4 1983009808
      %v226 = vunpack.c.0.s8 %v225
      %v227 = vlaneseq
      %v228 = vshrl.u32 %v227, 7
      %v229 = vsub.s32 %v226, %v228
      %v230 = vrot.slane %v216, %v229
      %v231 = vcombine.high %v223, %v223
      %v232 = vcombine.high %v230, %v230
      %233 = vrot.lane.b32.xlu0 %v223, 127
      %v234 = vpop.permute.xlu0 %233
      %235 = vrot.lane.b32.xlu0 %v231, 127
      %v236 = vpop.permute.xlu0 %235
      %237 = vrot.lane.b32.xlu0 %v230, 127
      %v238 = vpop.permute.xlu0 %237
      %239 = vrot.lane.b32.xlu0 %v232, 127
      %v240 = vpop.permute.xlu0 %239
      %vm241 = vcmask 1039360
      %v242 = vsel %vm241, %v234, %v236
      %v243 = vsel %vm241, %v236, %v238
      %v244 = vsel %vm241, %v238, %v240
      %vm245 = vcmask 31744
      %v247 = vsel %vm245, %v212, 0
      %v250 = vsel %vm245, %v214, 0
      %vm252 = vcmask 1041408
      %v254 = vsel %vm252, %v242, 0
      %v257 = vsel %vm252, %v243, 0
      %v260 = vsel %vm252, %v244, 0
      %262 = vmatprep.subr.bf16.mxu0 %v257
      %263 = vmatpush1.bf16.msra.mxu0 %v254
      %264 = vmatprep.subr.bf16.mxu0 0
      %265 = vmatpush1.bf16.msra.mxu0 0
      %266 = vmatprep.subr.bf16.mxu0 0
      %267 = vmatpush1.bf16.msra.mxu0 0
      %268 = vmatprep.subr.bf16.mxu0 0
      %269 = vmatpush1.bf16.msra.mxu0 0
      %270 = vmatprep.subr.bf16.mxu0 0
      %271 = vmatpush1.bf16.msra.mxu0 0
      %272 = vmatprep.subr.bf16.mxu0 0
      %273 = vmatpush1.bf16.msra.mxu0 0
      %274 = vmatprep.subr.bf16.mxu0 0
      %275 = vmatpush1.bf16.msra.mxu0 0
      %276 = vmatprep.subr.bf16.mxu0 0
      %277 = vmatpush1.bf16.msra.mxu0 0
      %278 = vmatprep.subr.bf16.mxu0 0
      %279 = vmatpush1.bf16.msra.mxu0 0
      %280 = vmatprep.subr.bf16.mxu0 0
      %281 = vmatpush1.bf16.msra.mxu0 0
      %282 = vmatprep.subr.bf16.mxu0 0
      %283 = vmatpush1.bf16.msra.mxu0 0
      %284 = vmatprep.subr.bf16.mxu0 0
      %285 = vmatpush1.bf16.msra.mxu0 0
      %286 = vmatprep.subr.bf16.mxu0 0
      %287 = vmatpush1.bf16.msra.mxu0 0
      %288 = vmatprep.subr.bf16.mxu0 0
      %289 = vmatpush1.bf16.msra.mxu0 0
      %290 = vmatprep.subr.bf16.mxu0 0
      %291 = vmatpush1.bf16.msra.mxu0 0
      %292 = vmatprep.subr.bf16.mxu0 0
      %293 = vmatpush1.bf16.msra.mxu0 0
      %294 = vmatprep.mubr.bf16.mxu0 0
      %295 = vmatmul.mubr.bf16.gmra.mrb[0].mxu0 %v247
      %v296 = vpop.f32.mrb[0].mxu0
      %v297 = vadd.f32 0.0, %v296
      %v298 = vpop.f32.mrb[0].mxu0
      %v299 = vadd.f32 0.0, %v298
      %v300 = vpop.f32.mrb[0].mxu0
      %v301 = vadd.f32 0.0, %v300
      %v302 = vpop.f32.mrb[0].mxu0
      %v303 = vadd.f32 0.0, %v302
      %304 = vmatprep.mubr.bf16.mxu0 0
      %305 = vmatmul.mubr.bf16.gmra.mrb[0].mxu0 %v250
      %v306 = vpop.f32.mrb[0].mxu0
      %v307 = vadd.f32 0.0, %v306
      %v308 = vpop.f32.mrb[0].mxu0
      %v309 = vadd.f32 0.0, %v308
      %v310 = vpop.f32.mrb[0].mxu0
      %v311 = vadd.f32 0.0, %v310
      %v312 = vpop.f32.mrb[0].mxu0
      %v313 = vadd.f32 0.0, %v312
      %314 = vdwg.mxu0
      %315 = vmatprep.subr.bf16.mxu0 0
      %316 = vmatpush1.bf16.msra.mxu0 %v260
      %317 = vmatprep.subr.bf16.mxu0 0
      %318 = vmatpush1.bf16.msra.mxu0 0
      %319 = vmatprep.subr.bf16.mxu0 0
      %320 = vmatpush1.bf16.msra.mxu0 0
      %321 = vmatprep.subr.bf16.mxu0 0
      %322 = vmatpush1.bf16.msra.mxu0 0
      %323 = vmatprep.subr.bf16.mxu0 0
      %324 = vmatpush1.bf16.msra.mxu0 0
      %325 = vmatprep.subr.bf16.mxu0 0
      %326 = vmatpush1.bf16.msra.mxu0 0
      %327 = vmatprep.subr.bf16.mxu0 0
      %328 = vmatpush1.bf16.msra.mxu0 0
      %329 = vmatprep.subr.bf16.mxu0 0
      %330 = vmatpush1.bf16.msra.mxu0 0
      %331 = vmatprep.subr.bf16.mxu0 0
      %332 = vmatpush1.bf16.msra.mxu0 0
      %333 = vmatprep.subr.bf16.mxu0 0
      %334 = vmatpush1.bf16.msra.mxu0 0
      %335 = vmatprep.subr.bf16.mxu0 0
      %336 = vmatpush1.bf16.msra.mxu0 0
      %337 = vmatprep.subr.bf16.mxu0 0
      %338 = vmatpush1.bf16.msra.mxu0 0
      %339 = vmatprep.subr.bf16.mxu0 0
      %340 = vmatpush1.bf16.msra.mxu0 0
      %341 = vmatprep.subr.bf16.mxu0 0
      %342 = vmatpush1.bf16.msra.mxu0 0
      %343 = vmatprep.subr.bf16.mxu0 0
      %344 = vmatpush1.bf16.msra.mxu0 0
      %345 = vmatprep.subr.bf16.mxu0 0
      %346 = vmatpush1.bf16.msra.mxu0 0
      %347 = vmatprep.mubr.bf16.mxu0 0
      %348 = vmatmul.mubr.bf16.gmra.mrb[0].mxu0 %v247
      %v349 = vpop.f32.mrb[0].mxu0
      %v350 = vadd.f32 0.0, %v349
      %v351 = vpop.f32.mrb[0].mxu0
      %v352 = vpop.f32.mrb[0].mxu0
      %v353 = vadd.f32 0.0, %v352
      %v354 = vpop.f32.mrb[0].mxu0
      %355 = vmatprep.mubr.bf16.mxu0 0
      %356 = vmatmul.mubr.bf16.gmra.mrb[0].mxu0 %v250
      %v357 = vpop.f32.mrb[0].mxu0
      %v358 = vadd.f32 0.0, %v357
      %v359 = vpop.f32.mrb[0].mxu0
      %v360 = vpop.f32.mrb[0].mxu0
      %v361 = vadd.f32 0.0, %v360
      %v362 = vpop.f32.mrb[0].mxu0
      %363 = vdwg.mxu0
      %v365 = vcombine.high %v195, %v195
      %v367 = vunpack.c.l.s4 1983009808
      %v368 = vunpack.c.0.s8 %v367
      %v369 = vlaneseq
      %v370 = vshrl.u32 %v369, 7
      %v371 = vsub.s32 %v368, %v370
      %v372 = vrot.slane %v195, %v371
      %v374 = vunpack.c.l.s4 1983009808
      %v375 = vunpack.c.0.s8 %v374
      %v376 = vlaneseq
      %v377 = vshrl.u32 %v376, 7
      %v378 = vsub.s32 %v375, %v377
      %v379 = vrot.slane %v365, %v378
      %v380 = vcombine.high %v372, %v372
      %v382 = vsel %vm245, %v209, 0
      %v385 = vsel %vm245, %v210, 0
      %v388 = vsel %vm252, %v372, 0
      %v391 = vsel %vm252, %v380, 0
      %v394 = vsel %vm252, %v379, 0
      %396 = vmatprep.subr.bf16.mxu0 %v391
      %397 = vmatpush1.bf16.msra.mxu0 %v388
      %398 = vmatprep.subr.bf16.mxu0 0
      %399 = vmatpush1.bf16.msra.mxu0 0
      %400 = vmatprep.subr.bf16.mxu0 0
      %401 = vmatpush1.bf16.msra.mxu0 0
      %402 = vmatprep.subr.bf16.mxu0 0
      %403 = vmatpush1.bf16.msra.mxu0 0
      %404 = vmatprep.subr.bf16.mxu0 0
      %405 = vmatpush1.bf16.msra.mxu0 0
      %406 = vmatprep.subr.bf16.mxu0 0
      %407 = vmatpush1.bf16.msra.mxu0 0
      %408 = vmatprep.subr.bf16.mxu0 0
      %409 = vmatpush1.bf16.msra.mxu0 0
      %410 = vmatprep.subr.bf16.mxu0 0
      %411 = vmatpush1.bf16.msra.mxu0 0
      %412 = vmatprep.subr.bf16.mxu0 0
      %413 = vmatpush1.bf16.msra.mxu0 0
      %414 = vmatprep.subr.bf16.mxu0 0
      %415 = vmatpush1.bf16.msra.mxu0 0
      %416 = vmatprep.subr.bf16.mxu0 0
      %417 = vmatpush1.bf16.msra.mxu0 0
      %418 = vmatprep.subr.bf16.mxu0 0
      %419 = vmatpush1.bf16.msra.mxu0 0
      %420 = vmatprep.subr.bf16.mxu0 0
      %421 = vmatpush1.bf16.msra.mxu0 0
      %422 = vmatprep.subr.bf16.mxu0 0
      %423 = vmatpush1.bf16.msra.mxu0 0
      %424 = vmatprep.subr.bf16.mxu0 0
      %425 = vmatpush1.bf16.msra.mxu0 0
      %426 = vmatprep.subr.bf16.mxu0 0
      %427 = vmatpush1.bf16.msra.mxu0 0
      %428 = vmatprep.mubr.bf16.mxu0 0
      %429 = vmatmul.mubr.bf16.gmra.mrb[0].mxu0 %v382
      %v430 = vpop.f32.mrb[0].mxu0
      %v431 = vadd.f32 %v297, %v430
      %v432 = vpop.f32.mrb[0].mxu0
      %v433 = vadd.f32 %v299, %v432
      %v434 = vpop.f32.mrb[0].mxu0
      %v435 = vadd.f32 %v301, %v434
      %v436 = vpop.f32.mrb[0].mxu0
      %v437 = vadd.f32 %v303, %v436
      %438 = vmatprep.mubr.bf16.mxu0 0
      %439 = vmatmul.mubr.bf16.gmra.mrb[0].mxu0 %v385
      %v440 = vpop.f32.mrb[0].mxu0
      %v441 = vadd.f32 %v307, %v440
      %v442 = vpop.f32.mrb[0].mxu0
      %v443 = vadd.f32 %v309, %v442
      %v444 = vpop.f32.mrb[0].mxu0
      %v445 = vadd.f32 %v311, %v444
      %v446 = vpop.f32.mrb[0].mxu0
      %v447 = vadd.f32 %v313, %v446
      %448 = vdwg.mxu0
      %449 = vmatprep.subr.bf16.mxu0 0
      %450 = vmatpush1.bf16.msra.mxu0 %v394
      %451 = vmatprep.subr.bf16.mxu0 0
      %452 = vmatpush1.bf16.msra.mxu0 0
      %453 = vmatprep.subr.bf16.mxu0 0
      %454 = vmatpush1.bf16.msra.mxu0 0
      %455 = vmatprep.subr.bf16.mxu0 0
      %456 = vmatpush1.bf16.msra.mxu0 0
      %457 = vmatprep.subr.bf16.mxu0 0
      %458 = vmatpush1.bf16.msra.mxu0 0
      %459 = vmatprep.subr.bf16.mxu0 0
      %460 = vmatpush1.bf16.msra.mxu0 0
      %461 = vmatprep.subr.bf16.mxu0 0
      %462 = vmatpush1.bf16.msra.mxu0 0
      %463 = vmatprep.subr.bf16.mxu0 0
      %464 = vmatpush1.bf16.msra.mxu0 0
      %465 = vmatprep.subr.bf16.mxu0 0
      %466 = vmatpush1.bf16.msra.mxu0 0
      %467 = vmatprep.subr.bf16.mxu0 0
      %468 = vmatpush1.bf16.msra.mxu0 0
      %469 = vmatprep.subr.bf16.mxu0 0
      %470 = vmatpush1.bf16.msra.mxu0 0
      %471 = vmatprep.subr.bf16.mxu0 0
      %472 = vmatpush1.bf16.msra.mxu0 0
      %473 = vmatprep.subr.bf16.mxu0 0
      %474 = vmatpush1.bf16.msra.mxu0 0
      %475 = vmatprep.subr.bf16.mxu0 0
      %476 = vmatpush1.bf16.msra.mxu0 0
      %477 = vmatprep.subr.bf16.mxu0 0
      %478 = vmatpush1.bf16.msra.mxu0 0
      %479 = vmatprep.subr.bf16.mxu0 0
      %480 = vmatpush1.bf16.msra.mxu0 0
      %481 = vmatprep.mubr.bf16.mxu0 0
      %482 = vmatmul.mubr.bf16.gmra.mrb[0].mxu0 %v382
      %v483 = vpop.f32.mrb[0].mxu0
      %v484 = vadd.f32 %v350, %v483
      %v485 = vpop.f32.mrb[0].mxu0
      %v486 = vpop.f32.mrb[0].mxu0
      %v487 = vadd.f32 %v353, %v486
      %v488 = vpop.f32.mrb[0].mxu0
      %489 = vmatprep.mubr.bf16.mxu0 0
      %490 = vmatmul.mubr.bf16.gmra.mrb[0].mxu0 %v385
      %v491 = vpop.f32.mrb[0].mxu0
      %v492 = vadd.f32 %v358, %v491
      %v493 = vpop.f32.mrb[0].mxu0
      %v494 = vpop.f32.mrb[0].mxu0
      %v495 = vadd.f32 %v361, %v494
      %v496 = vpop.f32.mrb[0].mxu0
      %497 = vdwg.mxu0
      %v498 = vld [vmem:[%s183] sm:$0xff]
      %v499 = vld [vmem:[%s1] sm:$0xf]
      %v500 = vld [vmem:[%s1 + $0x4] sm:$0xf]
      %v501 = vld [vmem:[%s1 + $0x8] sm:$0xf]
      %v502 = vld [vmem:[%s1 + $0xc] sm:$0xf]
      %v507 = vunpack.c.l.b16 %v499
      %v508 = vunpack.c.l.b16 %v500
      %v509 = vunpack.c.l.b16 %v501
      %v510 = vunpack.c.l.b16 %v502
      %v511 = vpack.c.b16 %v508, %v507
      %v512 = vpack.c.b16 %v510, %v509
      %513 = vrot.lane.b32.xlu0 %v511, 120
      %v514 = vpop.permute.xlu0 %513
      %515 = vrot.lane.b32.xlu0 %v512, 120
      %v516 = vpop.permute.xlu0 %515
      %v518 = vcombine.high %v498, %v498
      %v520 = vunpack.c.l.s4 1983009808
      %v521 = vunpack.c.0.s8 %v520
      %v522 = vlaneseq
      %v523 = vshrl.u32 %v522, 7
      %v524 = vsub.s32 %v521, %v523
      %v525 = vrot.slane %v498, %v524
      %v527 = vunpack.c.l.s4 1983009808
      %v528 = vunpack.c.0.s8 %v527
      %v529 = vlaneseq
      %v530 = vshrl.u32 %v529, 7
      %v531 = vsub.s32 %v528, %v530
      %v532 = vrot.slane %v518, %v531
      %v533 = vcombine.high %v525, %v525
      %v534 = vcombine.high %v532, %v532
      %535 = vrot.lane.b32.xlu0 %v525, 126
      %v536 = vpop.permute.xlu0 %535
      %537 = vrot.lane.b32.xlu0 %v533, 126
      %v538 = vpop.permute.xlu0 %537
      %539 = vrot.lane.b32.xlu0 %v532, 126
      %v540 = vpop.permute.xlu0 %539
      %541 = vrot.lane.b32.xlu0 %v534, 126
      %v542 = vpop.permute.xlu0 %541
      %vm543 = vcmask 1031168
      %v544 = vsel %vm543, %v536, %v538
      %v545 = vsel %vm543, %v538, %v540
      %v546 = vsel %vm543, %v540, %v542
      %v548 = vsel %vm245, %v514, 0
      %v551 = vsel %vm245, %v516, 0
      %v554 = vsel %vm252, %v544, 0
      %v557 = vsel %vm252, %v545, 0
      %v560 = vsel %vm252, %v546, 0
      %562 = vmatprep.subr.bf16.mxu0 %v557
      %563 = vmatpush1.bf16.msra.mxu0 %v554
      %564 = vmatprep.subr.bf16.mxu0 0
      %565 = vmatpush1.bf16.msra.mxu0 0
      %566 = vmatprep.subr.bf16.mxu0 0
      %567 = vmatpush1.bf16.msra.mxu0 0
      %568 = vmatprep.subr.bf16.mxu0 0
      %569 = vmatpush1.bf16.msra.mxu0 0
      %570 = vmatprep.subr.bf16.mxu0 0
      %571 = vmatpush1.bf16.msra.mxu0 0
      %572 = vmatprep.subr.bf16.mxu0 0
      %573 = vmatpush1.bf16.msra.mxu0 0
      %574 = vmatprep.subr.bf16.mxu0 0
      %575 = vmatpush1.bf16.msra.mxu0 0
      %576 = vmatprep.subr.bf16.mxu0 0
      %577 = vmatpush1.bf16.msra.mxu0 0
      %578 = vmatprep.subr.bf16.mxu0 0
      %579 = vmatpush1.bf16.msra.mxu0 0
      %580 = vmatprep.subr.bf16.mxu0 0
      %581 = vmatpush1.bf16.msra.mxu0 0
      %582 = vmatprep.subr.bf16.mxu0 0
      %583 = vmatpush1.bf16.msra.mxu0 0
      %584 = vmatprep.subr.bf16.mxu0 0
      %585 = vmatpush1.bf16.msra.mxu0 0
      %586 = vmatprep.subr.bf16.mxu0 0
      %587 = vmatpush1.bf16.msra.mxu0 0
      %588 = vmatprep.subr.bf16.mxu0 0
      %589 = vmatpush1.bf16.msra.mxu0 0
      %590 = vmatprep.subr.bf16.mxu0 0
      %591 = vmatpush1.bf16.msra.mxu0 0
      %592 = vmatprep.subr.bf16.mxu0 0
      %593 = vmatpush1.bf16.msra.mxu0 0
      %594 = vmatprep.mubr.bf16.mxu0 0
      %595 = vmatmul.mubr.bf16.gmra.mrb[0].mxu0 %v548
      %v596 = vpop.f32.mrb[0].mxu0
      %v597 = vadd.f32 0.0, %v596
      %v598 = vpop.f32.mrb[0].mxu0
      %v599 = vadd.f32 0.0, %v598
      %v600 = vpop.f32.mrb[0].mxu0
      %v601 = vadd.f32 0.0, %v600
      %v602 = vpop.f32.mrb[0].mxu0
      %v603 = vadd.f32 0.0, %v602
      %604 = vmatprep.mubr.bf16.mxu0 0
      %605 = vmatmul.mubr.bf16.gmra.mrb[0].mxu0 %v551
      %v606 = vpop.f32.mrb[0].mxu0
      %v607 = vadd.f32 0.0, %v606
      %v608 = vpop.f32.mrb[0].mxu0
      %v609 = vadd.f32 0.0, %v608
      %v610 = vpop.f32.mrb[0].mxu0
      %v611 = vadd.f32 0.0, %v610
      %v612 = vpop.f32.mrb[0].mxu0
      %v613 = vadd.f32 0.0, %v612
      %614 = vdwg.mxu0
      %615 = vmatprep.subr.bf16.mxu0 0
      %616 = vmatpush1.bf16.msra.mxu0 %v560
      %617 = vmatprep.subr.bf16.mxu0 0
      %618 = vmatpush1.bf16.msra.mxu0 0
      %619 = vmatprep.subr.bf16.mxu0 0
      %620 = vmatpush1.bf16.msra.mxu0 0
      %621 = vmatprep.subr.bf16.mxu0 0
      %622 = vmatpush1.bf16.msra.mxu0 0
      %623 = vmatprep.subr.bf16.mxu0 0
      %624 = vmatpush1.bf16.msra.mxu0 0
      %625 = vmatprep.subr.bf16.mxu0 0
      %626 = vmatpush1.bf16.msra.mxu0 0
      %627 = vmatprep.subr.bf16.mxu0 0
      %628 = vmatpush1.bf16.msra.mxu0 0
      %629 = vmatprep.subr.bf16.mxu0 0
      %630 = vmatpush1.bf16.msra.mxu0 0
      %631 = vmatprep.subr.bf16.mxu0 0
      %632 = vmatpush1.bf16.msra.mxu0 0
      %633 = vmatprep.subr.bf16.mxu0 0
      %634 = vmatpush1.bf16.msra.mxu0 0
      %635 = vmatprep.subr.bf16.mxu0 0
      %636 = vmatpush1.bf16.msra.mxu0 0
      %637 = vmatprep.subr.bf16.mxu0 0
      %638 = vmatpush1.bf16.msra.mxu0 0
      %639 = vmatprep.subr.bf16.mxu0 0
      %640 = vmatpush1.bf16.msra.mxu0 0
      %641 = vmatprep.subr.bf16.mxu0 0
      %642 = vmatpush1.bf16.msra.mxu0 0
      %643 = vmatprep.subr.bf16.mxu0 0
      %644 = vmatpush1.bf16.msra.mxu0 0
      %645 = vmatprep.subr.bf16.mxu0 0
      %646 = vmatpush1.bf16.msra.mxu0 0
      %647 = vmatprep.mubr.bf16.mxu0 0
      %648 = vmatmul.mubr.bf16.gmra.mrb[0].mxu0 %v548
      %v649 = vpop.f32.mrb[0].mxu0
      %v650 = vadd.f32 0.0, %v649
      %v651 = vpop.f32.mrb[0].mxu0
      %v652 = vpop.f32.mrb[0].mxu0
      %v653 = vadd.f32 0.0, %v652
      %v654 = vpop.f32.mrb[0].mxu0
      %655 = vmatprep.mubr.bf16.mxu0 0
      %656 = vmatmul.mubr.bf16.gmra.mrb[0].mxu0 %v551
      %v657 = vpop.f32.mrb[0].mxu0
      %v658 = vadd.f32 0.0, %v657
      %v659 = vpop.f32.mrb[0].mxu0
      %v660 = vpop.f32.mrb[0].mxu0
      %v661 = vadd.f32 0.0, %v660
      %v662 = vpop.f32.mrb[0].mxu0
      %663 = vdwg.mxu0
      %v664 = vadd.f32 %v431, %v597
      %v665 = vadd.f32 %v433, %v599
      %v666 = vadd.f32 %v484, %v650
      %v667 = vadd.f32 %v435, %v601
      %v668 = vadd.f32 %v437, %v603
      %v669 = vadd.f32 %v487, %v653
      %v670 = vadd.f32 %v441, %v607
      %v671 = vadd.f32 %v443, %v609
      %v672 = vadd.f32 %v492, %v658
      %v673 = vadd.f32 %v445, %v611
      %v674 = vadd.f32 %v447, %v613
      %v675 = vadd.f32 %v495, %v661
      %v676 = vld [vmem:[%s183] sm:$0xff]
      %v677 = vld [vmem:[%s1] sm:$0xf]
      %v678 = vld [vmem:[%s1 + $0x4] sm:$0xf]
      %v679 = vld [vmem:[%s1 + $0x8] sm:$0xf]
      %v680 = vld [vmem:[%s1 + $0xc] sm:$0xf]
      %v685 = vunpack.c.l.b16 %v677
      %v686 = vunpack.c.l.b16 %v678
      %v687 = vunpack.c.l.b16 %v679
      %v688 = vunpack.c.l.b16 %v680
      %v689 = vpack.c.b16 %v686, %v685
      %v690 = vpack.c.b16 %v688, %v687
      %691 = vrot.lane.b32.xlu0 %v689, 116
      %v692 = vpop.permute.xlu0 %691
      %693 = vrot.lane.b32.xlu0 %v690, 116
      %v694 = vpop.permute.xlu0 %693
      %v696 = vcombine.high %v676, %v676
      %v698 = vunpack.c.l.s4 1983009808
      %v699 = vunpack.c.0.s8 %v698
      %v700 = vlaneseq
      %v701 = vshrl.u32 %v700, 7
      %v702 = vsub.s32 %v699, %v701
      %v703 = vrot.slane %v676, %v702
      %v705 = vunpack.c.l.s4 1983009808
      %v706 = vunpack.c.0.s8 %v705
      %v707 = vlaneseq
      %v708 = vshrl.u32 %v707, 7
      %v709 = vsub.s32 %v706, %v708
      %v710 = vrot.slane %v696, %v709
      %v711 = vcombine.high %v703, %v703
      %v712 = vcombine.high %v710, %v710
      %713 = vrot.lane.b32.xlu0 %v703, 110
      %v714 = vpop.permute.xlu0 %713
      %715 = vrot.lane.b32.xlu0 %v711, 110
      %v716 = vpop.permute.xlu0 %715
      %717 = vrot.lane.b32.xlu0 %v710, 110
      %v718 = vpop.permute.xlu0 %717
      %719 = vrot.lane.b32.xlu0 %v712, 110
      %v720 = vpop.permute.xlu0 %719
      %vm721 = vcmask 900096
      %v722 = vsel %vm721, %v714, %v716
      %v723 = vsel %vm721, %v716, %v718
      %v724 = vsel %vm721, %v718, %v720
      %v726 = vsel %vm245, %v692, 0
      %v729 = vsel %vm245, %v694, 0
      %v732 = vsel %vm252, %v722, 0
      %v735 = vsel %vm252, %v723, 0
      %v738 = vsel %vm252, %v724, 0
      %740 = vmatprep.subr.bf16.mxu0 %v735
      %741 = vmatpush1.bf16.msra.mxu0 %v732
      %742 = vmatprep.subr.bf16.mxu0 0
      %743 = vmatpush1.bf16.msra.mxu0 0
      %744 = vmatprep.subr.bf16.mxu0 0
      %745 = vmatpush1.bf16.msra.mxu0 0
      %746 = vmatprep.subr.bf16.mxu0 0
      %747 = vmatpush1.bf16.msra.mxu0 0
      %748 = vmatprep.subr.bf16.mxu0 0
      %749 = vmatpush1.bf16.msra.mxu0 0
      %750 = vmatprep.subr.bf16.mxu0 0
      %751 = vmatpush1.bf16.msra.mxu0 0
      %752 = vmatprep.subr.bf16.mxu0 0
      %753 = vmatpush1.bf16.msra.mxu0 0
      %754 = vmatprep.subr.bf16.mxu0 0
      %755 = vmatpush1.bf16.msra.mxu0 0
      %756 = vmatprep.subr.bf16.mxu0 0
      %757 = vmatpush1.bf16.msra.mxu0 0
      %758 = vmatprep.subr.bf16.mxu0 0
      %759 = vmatpush1.bf16.msra.mxu0 0
      %760 = vmatprep.subr.bf16.mxu0 0
      %761 = vmatpush1.bf16.msra.mxu0 0
      %762 = vmatprep.subr.bf16.mxu0 0
      %763 = vmatpush1.bf16.msra.mxu0 0
      %764 = vmatprep.subr.bf16.mxu0 0
      %765 = vmatpush1.bf16.msra.mxu0 0
      %766 = vmatprep.subr.bf16.mxu0 0
      %767 = vmatpush1.bf16.msra.mxu0 0
      %768 = vmatprep.subr.bf16.mxu0 0
      %769 = vmatpush1.bf16.msra.mxu0 0
      %770 = vmatprep.subr.bf16.mxu0 0
      %771 = vmatpush1.bf16.msra.mxu0 0
      %772 = vmatprep.mubr.bf16.mxu0 0
      %773 = vmatmul.mubr.bf16.gmra.mrb[0].mxu0 %v726
      %v774 = vpop.f32.mrb[0].mxu0
      %v775 = vadd.f32 0.0, %v774
      %v776 = vpop.f32.mrb[0].mxu0
      %v777 = vadd.f32 0.0, %v776
      %v778 = vpop.f32.mrb[0].mxu0
      %v779 = vadd.f32 0.0, %v778
      %v780 = vpop.f32.mrb[0].mxu0
      %v781 = vadd.f32 0.0, %v780
      %782 = vmatprep.mubr.bf16.mxu0 0
      %783 = vmatmul.mubr.bf16.gmra.mrb[0].mxu0 %v729
      %v784 = vpop.f32.mrb[0].mxu0
      %v785 = vadd.f32 0.0, %v784
      %v786 = vpop.f32.mrb[0].mxu0
      %v787 = vadd.f32 0.0, %v786
      %v788 = vpop.f32.mrb[0].mxu0
      %v789 = vadd.f32 0.0, %v788
      %v790 = vpop.f32.mrb[0].mxu0
      %v791 = vadd.f32 0.0, %v790
      %792 = vdwg.mxu0
      %793 = vmatprep.subr.bf16.mxu0 0
      %794 = vmatpush1.bf16.msra.mxu0 %v738
      %795 = vmatprep.subr.bf16.mxu0 0
      %796 = vmatpush1.bf16.msra.mxu0 0
      %797 = vmatprep.subr.bf16.mxu0 0
      %798 = vmatpush1.bf16.msra.mxu0 0
      %799 = vmatprep.subr.bf16.mxu0 0
      %800 = vmatpush1.bf16.msra.mxu0 0
      %801 = vmatprep.subr.bf16.mxu0 0
      %802 = vmatpush1.bf16.msra.mxu0 0
      %803 = vmatprep.subr.bf16.mxu0 0
      %804 = vmatpush1.bf16.msra.mxu0 0
      %805 = vmatprep.subr.bf16.mxu0 0
      %806 = vmatpush1.bf16.msra.mxu0 0
      %807 = vmatprep.subr.bf16.mxu0 0
      %808 = vmatpush1.bf16.msra.mxu0 0
      %809 = vmatprep.subr.bf16.mxu0 0
      %810 = vmatpush1.bf16.msra.mxu0 0
      %811 = vmatprep.subr.bf16.mxu0 0
      %812 = vmatpush1.bf16.msra.mxu0 0
      %813 = vmatprep.subr.bf16.mxu0 0
      %814 = vmatpush1.bf16.msra.mxu0 0
      %815 = vmatprep.subr.bf16.mxu0 0
      %816 = vmatpush1.bf16.msra.mxu0 0
      %817 = vmatprep.subr.bf16.mxu0 0
      %818 = vmatpush1.bf16.msra.mxu0 0
      %819 = vmatprep.subr.bf16.mxu0 0
      %820 = vmatpush1.bf16.msra.mxu0 0
      %821 = vmatprep.subr.bf16.mxu0 0
      %822 = vmatpush1.bf16.msra.mxu0 0
      %823 = vmatprep.subr.bf16.mxu0 0
      %824 = vmatpush1.bf16.msra.mxu0 0
      %825 = vmatprep.mubr.bf16.mxu0 0
      %826 = vmatmul.mubr.bf16.gmra.mrb[0].mxu0 %v726
      %v827 = vpop.f32.mrb[0].mxu0
      %v828 = vadd.f32 0.0, %v827
      %v829 = vpop.f32.mrb[0].mxu0
      %v830 = vpop.f32.mrb[0].mxu0
      %v831 = vadd.f32 0.0, %v830
      %v832 = vpop.f32.mrb[0].mxu0
      %833 = vmatprep.mubr.bf16.mxu0 0
      %834 = vmatmul.mubr.bf16.gmra.mrb[0].mxu0 %v729
      %v835 = vpop.f32.mrb[0].mxu0
      %v836 = vadd.f32 0.0, %v835
      %v837 = vpop.f32.mrb[0].mxu0
      %v838 = vpop.f32.mrb[0].mxu0
      %v839 = vadd.f32 0.0, %v838
      %v840 = vpop.f32.mrb[0].mxu0
      %841 = vdwg.mxu0
      %v842 = vadd.f32 %v664, %v775
      %v843 = vadd.f32 %v665, %v777
      %v844 = vadd.f32 %v666, %v828
      %v845 = vadd.f32 %v667, %v779
      %v846 = vadd.f32 %v668, %v781
      %v847 = vadd.f32 %v669, %v831
      %v848 = vadd.f32 %v670, %v785
      %v849 = vadd.f32 %v671, %v787
      %v850 = vadd.f32 %v672, %v836
      %v851 = vadd.f32 %v673, %v789
      %v852 = vadd.f32 %v674, %v791
      %v853 = vadd.f32 %v675, %v839
      %v854 = vld [vmem:[%s183] sm:$0xff]
      %v855 = vld [vmem:[%s1] sm:$0xf]
      %v856 = vld [vmem:[%s1 + $0x4] sm:$0xf]
      %v857 = vld [vmem:[%s1 + $0x8] sm:$0xf]
      %v858 = vld [vmem:[%s1 + $0xc] sm:$0xf]
      %v863 = vunpack.c.l.b16 %v855
      %v864 = vunpack.c.l.b16 %v856
      %v865 = vunpack.c.l.b16 %v857
      %v866 = vunpack.c.l.b16 %v858
      %v867 = vpack.c.b16 %v864, %v863
      %v868 = vpack.c.b16 %v866, %v865
      %869 = vrot.lane.b32.xlu0 %v867, 112
      %v870 = vpop.permute.xlu0 %869
      %871 = vrot.lane.b32.xlu0 %v868, 112
      %v872 = vpop.permute.xlu0 %871
      %v874 = vcombine.high %v854, %v854
      %v876 = vunpack.c.l.s4 1983009808
      %v877 = vunpack.c.0.s8 %v876
      %v878 = vlaneseq
      %v879 = vshrl.u32 %v878, 7
      %v880 = vsub.s32 %v877, %v879
      %v881 = vrot.slane %v854, %v880
      %v883 = vunpack.c.l.s4 1983009808
      %v884 = vunpack.c.0.s8 %v883
      %v885 = vlaneseq
      %v886 = vshrl.u32 %v885, 7
      %v887 = vsub.s32 %v884, %v886
      %v888 = vrot.slane %v874, %v887
      %v889 = vcombine.high %v881, %v881
      %v890 = vcombine.high %v888, %v888
      %891 = vrot.lane.b32.xlu0 %v881, 109
      %v892 = vpop.permute.xlu0 %891
      %893 = vrot.lane.b32.xlu0 %v889, 109
      %v894 = vpop.permute.xlu0 %893
      %895 = vrot.lane.b32.xlu0 %v888, 109
      %v896 = vpop.permute.xlu0 %895
      %897 = vrot.lane.b32.xlu0 %v890, 109
      %v898 = vpop.permute.xlu0 %897
      %vm899 = vcmask 891904
      %v900 = vsel %vm899, %v892, %v894
      %v901 = vsel %vm899, %v894, %v896
      %v902 = vsel %vm899, %v896, %v898
      %v904 = vsel %vm245, %v870, 0
      %v907 = vsel %vm245, %v872, 0
      %v910 = vsel %vm252, %v900, 0
      %v913 = vsel %vm252, %v901, 0
      %v916 = vsel %vm252, %v902, 0
      %918 = vmatprep.subr.bf16.mxu0 %v913
      %919 = vmatpush1.bf16.msra.mxu0 %v910
      %920 = vmatprep.subr.bf16.mxu0 0
      %921 = vmatpush1.bf16.msra.mxu0 0
      %922 = vmatprep.subr.bf16.mxu0 0
      %923 = vmatpush1.bf16.msra.mxu0 0
      %924 = vmatprep.subr.bf16.mxu0 0
      %925 = vmatpush1.bf16.msra.mxu0 0
      %926 = vmatprep.subr.bf16.mxu0 0
      %927 = vmatpush1.bf16.msra.mxu0 0
      %928 = vmatprep.subr.bf16.mxu0 0
      %929 = vmatpush1.bf16.msra.mxu0 0
      %930 = vmatprep.subr.bf16.mxu0 0
      %931 = vmatpush1.bf16.msra.mxu0 0
      %932 = vmatprep.subr.bf16.mxu0 0
      %933 = vmatpush1.bf16.msra.mxu0 0
      %934 = vmatprep.subr.bf16.mxu0 0
      %935 = vmatpush1.bf16.msra.mxu0 0
      %936 = vmatprep.subr.bf16.mxu0 0
      %937 = vmatpush1.bf16.msra.mxu0 0
      %938 = vmatprep.subr.bf16.mxu0 0
      %939 = vmatpush1.bf16.msra.mxu0 0
      %940 = vmatprep.subr.bf16.mxu0 0
      %941 = vmatpush1.bf16.msra.mxu0 0
      %942 = vmatprep.subr.bf16.mxu0 0
      %943 = vmatpush1.bf16.msra.mxu0 0
      %944 = vmatprep.subr.bf16.mxu0 0
      %945 = vmatpush1.bf16.msra.mxu0 0
      %946 = vmatprep.subr.bf16.mxu0 0
      %947 = vmatpush1.bf16.msra.mxu0 0
      %948 = vmatprep.subr.bf16.mxu0 0
      %949 = vmatpush1.bf16.msra.mxu0 0
      %950 = vmatprep.mubr.bf16.mxu0 0
      %951 = vmatmul.mubr.bf16.gmra.mrb[0].mxu0 %v904
      %v952 = vpop.f32.mrb[0].mxu0
      %v953 = vadd.f32 0.0, %v952
      %v954 = vpop.f32.mrb[0].mxu0
      %v955 = vadd.f32 0.0, %v954
      %v956 = vpop.f32.mrb[0].mxu0
      %v957 = vadd.f32 0.0, %v956
      %v958 = vpop.f32.mrb[0].mxu0
      %v959 = vadd.f32 0.0, %v958
      %960 = vmatprep.mubr.bf16.mxu0 0
      %961 = vmatmul.mubr.bf16.gmra.mrb[0].mxu0 %v907
      %v962 = vpop.f32.mrb[0].mxu0
      %v963 = vadd.f32 0.0, %v962
      %v964 = vpop.f32.mrb[0].mxu0
      %v965 = vadd.f32 0.0, %v964
      %v966 = vpop.f32.mrb[0].mxu0
      %v967 = vadd.f32 0.0, %v966
      %v968 = vpop.f32.mrb[0].mxu0
      %v969 = vadd.f32 0.0, %v968
      %970 = vdwg.mxu0
      %971 = vmatprep.subr.bf16.mxu0 0
      %972 = vmatpush1.bf16.msra.mxu0 %v916
      %973 = vmatprep.subr.bf16.mxu0 0
      %974 = vmatpush1.bf16.msra.mxu0 0
      %975 = vmatprep.subr.bf16.mxu0 0
      %976 = vmatpush1.bf16.msra.mxu0 0
      %977 = vmatprep.subr.bf16.mxu0 0
      %978 = vmatpush1.bf16.msra.mxu0 0
      %979 = vmatprep.subr.bf16.mxu0 0
      %980 = vmatpush1.bf16.msra.mxu0 0
      %981 = vmatprep.subr.bf16.mxu0 0
      %982 = vmatpush1.bf16.msra.mxu0 0
      %983 = vmatprep.subr.bf16.mxu0 0
      %984 = vmatpush1.bf16.msra.mxu0 0
      %985 = vmatprep.subr.bf16.mxu0 0
      %986 = vmatpush1.bf16.msra.mxu0 0
      %987 = vmatprep.subr.bf16.mxu0 0
      %988 = vmatpush1.bf16.msra.mxu0 0
      %989 = vmatprep.subr.bf16.mxu0 0
      %990 = vmatpush1.bf16.msra.mxu0 0
      %991 = vmatprep.subr.bf16.mxu0 0
      %992 = vmatpush1.bf16.msra.mxu0 0
      %993 = vmatprep.subr.bf16.mxu0 0
      %994 = vmatpush1.bf16.msra.mxu0 0
      %995 = vmatprep.subr.bf16.mxu0 0
      %996 = vmatpush1.bf16.msra.mxu0 0
      %997 = vmatprep.subr.bf16.mxu0 0
      %998 = vmatpush1.bf16.msra.mxu0 0
      %999 = vmatprep.subr.bf16.mxu0 0
      %1000 = vmatpush1.bf16.msra.mxu0 0
      %1001 = vmatprep.subr.bf16.mxu0 0
      %1002 = vmatpush1.bf16.msra.mxu0 0
      %1003 = vmatprep.mubr.bf16.mxu0 0
      %1004 = vmatmul.mubr.bf16.gmra.mrb[0].mxu0 %v904
      %v1005 = vpop.f32.mrb[0].mxu0
      %v1006 = vadd.f32 0.0, %v1005
      %v1007 = vpop.f32.mrb[0].mxu0
      %v1008 = vpop.f32.mrb[0].mxu0
      %v1009 = vadd.f32 0.0, %v1008
      %v1010 = vpop.f32.mrb[0].mxu0
      %1011 = vmatprep.mubr.bf16.mxu0 0
      %1012 = vmatmul.mubr.bf16.gmra.mrb[0].mxu0 %v907
      %v1013 = vpop.f32.mrb[0].mxu0
      %v1014 = vadd.f32 0.0, %v1013
      %v1015 = vpop.f32.mrb[0].mxu0
      %v1016 = vpop.f32.mrb[0].mxu0
      %v1017 = vadd.f32 0.0, %v1016
      %v1018 = vpop.f32.mrb[0].mxu0
      %1019 = vdwg.mxu0
      %v1020 = vadd.f32 %v842, %v953
      %v1021 = vadd.f32 %v843, %v955
      %v1022 = vadd.f32 %v844, %v1006
      %v1023 = vadd.f32 %v845, %v957
      %v1024 = vadd.f32 %v846, %v959
      %v1025 = vadd.f32 %v847, %v1009
      %v1026 = vadd.f32 %v848, %v963
      %v1027 = vadd.f32 %v849, %v965
      %v1028 = vadd.f32 %v850, %v1014
      %v1029 = vadd.f32 %v851, %v967
      %v1030 = vadd.f32 %v852, %v969
      %v1031 = vadd.f32 %v853, %v1017
      %v1032 = vld [vmem:[%s183] sm:$0xff]
      %v1033 = vld [vmem:[%s1] sm:$0xf]
      %v1034 = vld [vmem:[%s1 + $0x4] sm:$0xf]
      %v1035 = vld [vmem:[%s1 + $0x8] sm:$0xf]
      %v1036 = vld [vmem:[%s1 + $0xc] sm:$0xf]
      %v1041 = vunpack.c.l.b16 %v1033
      %v1042 = vunpack.c.l.b16 %v1034
      %v1043 = vunpack.c.l.b16 %v1035
      %v1044 = vunpack.c.l.b16 %v1036
      %v1045 = vpack.c.b16 %v1042, %v1041
      %v1046 = vpack.c.b16 %v1044, %v1043
      %1047 = vrot.lane.b32.xlu0 %v1045, 108
      %v1048 = vpop.permute.xlu0 %1047
      %1049 = vrot.lane.b32.xlu0 %v1046, 108
      %v1050 = vpop.permute.xlu0 %1049
      %v1052 = vcombine.high %v1032, %v1032
      %v1054 = vunpack.c.l.s4 1983009808
      %v1055 = vunpack.c.0.s8 %v1054
      %v1056 = vlaneseq
      %v1057 = vshrl.u32 %v1056, 7
      %v1058 = vsub.s32 %v1055, %v1057
      %v1059 = vrot.slane %v1032, %v1058
      %v1061 = vunpack.c.l.s4 1983009808
      %v1062 = vunpack.c.0.s8 %v1061
      %v1063 = vlaneseq
      %v1064 = vshrl.u32 %v1063, 7
      %v1065 = vsub.s32 %v1062, %v1064
      %v1066 = vrot.slane %v1052, %v1065
      %v1067 = vcombine.high %v1059, %v1059
      %v1068 = vcombine.high %v1066, %v1066
      %1069 = vrot.lane.b32.xlu0 %v1059, 108
      %v1070 = vpop.permute.xlu0 %1069
      %1071 = vrot.lane.b32.xlu0 %v1067, 108
      %v1072 = vpop.permute.xlu0 %1071
      %1073 = vrot.lane.b32.xlu0 %v1066, 108
      %v1074 = vpop.permute.xlu0 %1073
      %1075 = vrot.lane.b32.xlu0 %v1068, 108
      %v1076 = vpop.permute.xlu0 %1075
      %vm1077 = vcmask 883712
      %v1078 = vsel %vm1077, %v1070, %v1072
      %v1079 = vsel %vm1077, %v1072, %v1074
      %v1080 = vsel %vm1077, %v1074, %v1076
      %v1082 = vsel %vm245, %v1048, 0
      %v1085 = vsel %vm245, %v1050, 0
      %v1088 = vsel %vm252, %v1078, 0
      %v1091 = vsel %vm252, %v1079, 0
      %v1094 = vsel %vm252, %v1080, 0
      %1096 = vmatprep.subr.bf16.mxu0 %v1091
      %1097 = vmatpush1.bf16.msra.mxu0 %v1088
      %1098 = vmatprep.subr.bf16.mxu0 0
      %1099 = vmatpush1.bf16.msra.mxu0 0
      %1100 = vmatprep.subr.bf16.mxu0 0
      %1101 = vmatpush1.bf16.msra.mxu0 0
      %1102 = vmatprep.subr.bf16.mxu0 0
      %1103 = vmatpush1.bf16.msra.mxu0 0
      %1104 = vmatprep.subr.bf16.mxu0 0
      %1105 = vmatpush1.bf16.msra.mxu0 0
      %1106 = vmatprep.subr.bf16.mxu0 0
      %1107 = vmatpush1.bf16.msra.mxu0 0
      %1108 = vmatprep.subr.bf16.mxu0 0
      %1109 = vmatpush1.bf16.msra.mxu0 0
      %1110 = vmatprep.subr.bf16.mxu0 0
      %1111 = vmatpush1.bf16.msra.mxu0 0
      %1112 = vmatprep.subr.bf16.mxu0 0
      %1113 = vmatpush1.bf16.msra.mxu0 0
      %1114 = vmatprep.subr.bf16.mxu0 0
      %1115 = vmatpush1.bf16.msra.mxu0 0
      %1116 = vmatprep.subr.bf16.mxu0 0
      %1117 = vmatpush1.bf16.msra.mxu0 0
      %1118 = vmatprep.subr.bf16.mxu0 0
      %1119 = vmatpush1.bf16.msra.mxu0 0
      %1120 = vmatprep.subr.bf16.mxu0 0
      %1121 = vmatpush1.bf16.msra.mxu0 0
      %1122 = vmatprep.subr.bf16.mxu0 0
      %1123 = vmatpush1.bf16.msra.mxu0 0
      %1124 = vmatprep.subr.bf16.mxu0 0
      %1125 = vmatpush1.bf16.msra.mxu0 0
      %1126 = vmatprep.subr.bf16.mxu0 0
      %1127 = vmatpush1.bf16.msra.mxu0 0
      %1128 = vmatprep.mubr.bf16.mxu0 0
      %1129 = vmatmul.mubr.bf16.gmra.mrb[0].mxu0 %v1082
      %v1130 = vpop.f32.mrb[0].mxu0
      %v1131 = vadd.f32 0.0, %v1130
      %v1132 = vpop.f32.mrb[0].mxu0
      %v1133 = vadd.f32 0.0, %v1132
      %v1134 = vpop.f32.mrb[0].mxu0
      %v1135 = vadd.f32 0.0, %v1134
      %v1136 = vpop.f32.mrb[0].mxu0
      %v1137 = vadd.f32 0.0, %v1136
      %1138 = vmatprep.mubr.bf16.mxu0 0
      %1139 = vmatmul.mubr.bf16.gmra.mrb[0].mxu0 %v1085
      %v1140 = vpop.f32.mrb[0].mxu0
      %v1141 = vadd.f32 0.0, %v1140
      %v1142 = vpop.f32.mrb[0].mxu0
      %v1143 = vadd.f32 0.0, %v1142
      %v1144 = vpop.f32.mrb[0].mxu0
      %v1145 = vadd.f32 0.0, %v1144
      %v1146 = vpop.f32.mrb[0].mxu0
      %v1147 = vadd.f32 0.0, %v1146
      %1148 = vdwg.mxu0
      %1149 = vmatprep.subr.bf16.mxu0 0
      %1150 = vmatpush1.bf16.msra.mxu0 %v1094
      %1151 = vmatprep.subr.bf16.mxu0 0
      %1152 = vmatpush1.bf16.msra.mxu0 0
      %1153 = vmatprep.subr.bf16.mxu0 0
      %1154 = vmatpush1.bf16.msra.mxu0 0
      %1155 = vmatprep.subr.bf16.mxu0 0
      %1156 = vmatpush1.bf16.msra.mxu0 0
      %1157 = vmatprep.subr.bf16.mxu0 0
      %1158 = vmatpush1.bf16.msra.mxu0 0
      %1159 = vmatprep.subr.bf16.mxu0 0
      %1160 = vmatpush1.bf16.msra.mxu0 0
      %1161 = vmatprep.subr.bf16.mxu0 0
      %1162 = vmatpush1.bf16.msra.mxu0 0
      %1163 = vmatprep.subr.bf16.mxu0 0
      %1164 = vmatpush1.bf16.msra.mxu0 0
      %1165 = vmatprep.subr.bf16.mxu0 0
      %1166 = vmatpush1.bf16.msra.mxu0 0
      %1167 = vmatprep.subr.bf16.mxu0 0
      %1168 = vmatpush1.bf16.msra.mxu0 0
      %1169 = vmatprep.subr.bf16.mxu0 0
      %1170 = vmatpush1.bf16.msra.mxu0 0
      %1171 = vmatprep.subr.bf16.mxu0 0
      %1172 = vmatpush1.bf16.msra.mxu0 0
      %1173 = vmatprep.subr.bf16.mxu0 0
      %1174 = vmatpush1.bf16.msra.mxu0 0
      %1175 = vmatprep.subr.bf16.mxu0 0
      %1176 = vmatpush1.bf16.msra.mxu0 0
      %1177 = vmatprep.subr.bf16.mxu0 0
      %1178 = vmatpush1.bf16.msra.mxu0 0
      %1179 = vmatprep.subr.bf16.mxu0 0
      %1180 = vmatpush1.bf16.msra.mxu0 0
      %1181 = vmatprep.mubr.bf16.mxu0 0
      %1182 = vmatmul.mubr.bf16.gmra.mrb[0].mxu0 %v1082
      %v1183 = vpop.f32.mrb[0].mxu0
      %v1184 = vadd.f32 0.0, %v1183
      %v1185 = vpop.f32.mrb[0].mxu0
      %v1186 = vpop.f32.mrb[0].mxu0
      %v1187 = vadd.f32 0.0, %v1186
      %v1188 = vpop.f32.mrb[0].mxu0
      %1189 = vmatprep.mubr.bf16.mxu0 0
      %1190 = vmatmul.mubr.bf16.gmra.mrb[0].mxu0 %v1085
      %v1191 = vpop.f32.mrb[0].mxu0
      %v1192 = vadd.f32 0.0, %v1191
      %v1193 = vpop.f32.mrb[0].mxu0
      %v1194 = vpop.f32.mrb[0].mxu0
      %v1195 = vadd.f32 0.0, %v1194
      %v1196 = vpop.f32.mrb[0].mxu0
      %1197 = vdwg.mxu0
      %v1198 = vadd.f32 %v1020, %v1131
      %v1199 = vadd.f32 %v1021, %v1133
      %v1200 = vadd.f32 %v1022, %v1184
      %v1201 = vadd.f32 %v1023, %v1135
      %v1202 = vadd.f32 %v1024, %v1137
      %v1203 = vadd.f32 %v1025, %v1187
      %v1204 = vadd.f32 %v1026, %v1141
      %v1205 = vadd.f32 %v1027, %v1143
      %v1206 = vadd.f32 %v1028, %v1192
      %v1207 = vadd.f32 %v1029, %v1145
      %v1208 = vadd.f32 %v1030, %v1147
      %v1209 = vadd.f32 %v1031, %v1195
      %v1210 = vld [vmem:[%s183] sm:$0xff]
      %v1211 = vld [vmem:[%s1] sm:$0xf]
      %v1212 = vld [vmem:[%s1 + $0x4] sm:$0xf]
      %v1213 = vld [vmem:[%s1 + $0x8] sm:$0xf]
      %v1214 = vld [vmem:[%s1 + $0xc] sm:$0xf]
      %v1219 = vunpack.c.l.b16 %v1211
      %v1220 = vunpack.c.l.b16 %v1212
      %v1221 = vunpack.c.l.b16 %v1213
      %v1222 = vunpack.c.l.b16 %v1214
      %v1223 = vpack.c.b16 %v1220, %v1219
      %v1224 = vpack.c.b16 %v1222, %v1221
      %1225 = vrot.lane.b32.xlu0 %v1223, 104
      %v1226 = vpop.permute.xlu0 %1225
      %1227 = vrot.lane.b32.xlu0 %v1224, 104
      %v1228 = vpop.permute.xlu0 %1227
      %v1230 = vcombine.high %v1210, %v1210
      %v1232 = vunpack.c.l.s4 1983009808
      %v1233 = vunpack.c.0.s8 %v1232
      %v1234 = vlaneseq
      %v1235 = vshrl.u32 %v1234, 7
      %v1236 = vsub.s32 %v1233, %v1235
      %v1237 = vrot.slane %v1210, %v1236
      %v1239 = vunpack.c.l.s4 1983009808
      %v1240 = vunpack.c.0.s8 %v1239
      %v1241 = vlaneseq
      %v1242 = vshrl.u32 %v1241, 7
      %v1243 = vsub.s32 %v1240, %v1242
      %v1244 = vrot.slane %v1230, %v1243
      %v1245 = vcombine.high %v1237, %v1237
      %v1246 = vcombine.high %v1244, %v1244
      %1247 = vrot.lane.b32.xlu0 %v1237, 92
      %v1248 = vpop.permute.xlu0 %1247
      %1249 = vrot.lane.b32.xlu0 %v1245, 92
      %v1250 = vpop.permute.xlu0 %1249
      %1251 = vrot.lane.b32.xlu0 %v1244, 92
      %v1252 = vpop.permute.xlu0 %1251
      %1253 = vrot.lane.b32.xlu0 %v1246, 92
      %v1254 = vpop.permute.xlu0 %1253
      %vm1255 = vcmask 752640
      %v1256 = vsel %vm1255, %v1248, %v1250
      %v1257 = vsel %vm1255, %v1250, %v1252
      %v1258 = vsel %vm1255, %v1252, %v1254
      %v1260 = vsel %vm245, %v1226, 0
      %v1263 = vsel %vm245, %v1228, 0
      %v1266 = vsel %vm252, %v1256, 0
      %v1269 = vsel %vm252, %v1257, 0
      %v1272 = vsel %vm252, %v1258, 0
      %1274 = vmatprep.subr.bf16.mxu0 %v1269
      %1275 = vmatpush1.bf16.msra.mxu0 %v1266
      %1276 = vmatprep.subr.bf16.mxu0 0
      %1277 = vmatpush1.bf16.msra.mxu0 0
      %1278 = vmatprep.subr.bf16.mxu0 0
      %1279 = vmatpush1.bf16.msra.mxu0 0
      %1280 = vmatprep.subr.bf16.mxu0 0
      %1281 = vmatpush1.bf16.msra.mxu0 0
      %1282 = vmatprep.subr.bf16.mxu0 0
      %1283 = vmatpush1.bf16.msra.mxu0 0
      %1284 = vmatprep.subr.bf16.mxu0 0
      %1285 = vmatpush1.bf16.msra.mxu0 0
      %1286 = vmatprep.subr.bf16.mxu0 0
      %1287 = vmatpush1.bf16.msra.mxu0 0
      %1288 = vmatprep.subr.bf16.mxu0 0
      %1289 = vmatpush1.bf16.msra.mxu0 0
      %1290 = vmatprep.subr.bf16.mxu0 0
      %1291 = vmatpush1.bf16.msra.mxu0 0
      %1292 = vmatprep.subr.bf16.mxu0 0
      %1293 = vmatpush1.bf16.msra.mxu0 0
      %1294 = vmatprep.subr.bf16.mxu0 0
      %1295 = vmatpush1.bf16.msra.mxu0 0
      %1296 = vmatprep.subr.bf16.mxu0 0
      %1297 = vmatpush1.bf16.msra.mxu0 0
      %1298 = vmatprep.subr.bf16.mxu0 0
      %1299 = vmatpush1.bf16.msra.mxu0 0
      %1300 = vmatprep.subr.bf16.mxu0 0
      %1301 = vmatpush1.bf16.msra.mxu0 0
      %1302 = vmatprep.subr.bf16.mxu0 0
      %1303 = vmatpush1.bf16.msra.mxu0 0
      %1304 = vmatprep.subr.bf16.mxu0 0
      %1305 = vmatpush1.bf16.msra.mxu0 0
      %1306 = vmatprep.mubr.bf16.mxu0 0
      %1307 = vmatmul.mubr.bf16.gmra.mrb[0].mxu0 %v1260
      %v1308 = vpop.f32.mrb[0].mxu0
      %v1309 = vadd.f32 0.0, %v1308
      %v1310 = vpop.f32.mrb[0].mxu0
      %v1311 = vadd.f32 0.0, %v1310
      %v1312 = vpop.f32.mrb[0].mxu0
      %v1313 = vadd.f32 0.0, %v1312
      %v1314 = vpop.f32.mrb[0].mxu0
      %v1315 = vadd.f32 0.0, %v1314
      %1316 = vmatprep.mubr.bf16.mxu0 0
      %1317 = vmatmul.mubr.bf16.gmra.mrb[0].mxu0 %v1263
      %v1318 = vpop.f32.mrb[0].mxu0
      %v1319 = vadd.f32 0.0, %v1318
      %v1320 = vpop.f32.mrb[0].mxu0
      %v1321 = vadd.f32 0.0, %v1320
      %v1322 = vpop.f32.mrb[0].mxu0
      %v1323 = vadd.f32 0.0, %v1322
      %v1324 = vpop.f32.mrb[0].mxu0
      %v1325 = vadd.f32 0.0, %v1324
      %1326 = vdwg.mxu0
      %1327 = vmatprep.subr.bf16.mxu0 0
      %1328 = vmatpush1.bf16.msra.mxu0 %v1272
      %1329 = vmatprep.subr.bf16.mxu0 0
      %1330 = vmatpush1.bf16.msra.mxu0 0
      %1331 = vmatprep.subr.bf16.mxu0 0
      %1332 = vmatpush1.bf16.msra.mxu0 0
      %1333 = vmatprep.subr.bf16.mxu0 0
      %1334 = vmatpush1.bf16.msra.mxu0 0
      %1335 = vmatprep.subr.bf16.mxu0 0
      %1336 = vmatpush1.bf16.msra.mxu0 0
      %1337 = vmatprep.subr.bf16.mxu0 0
      %1338 = vmatpush1.bf16.msra.mxu0 0
      %1339 = vmatprep.subr.bf16.mxu0 0
      %1340 = vmatpush1.bf16.msra.mxu0 0
      %1341 = vmatprep.subr.bf16.mxu0 0
      %1342 = vmatpush1.bf16.msra.mxu0 0
      %1343 = vmatprep.subr.bf16.mxu0 0
      %1344 = vmatpush1.bf16.msra.mxu0 0
      %1345 = vmatprep.subr.bf16.mxu0 0
      %1346 = vmatpush1.bf16.msra.mxu0 0
      %1347 = vmatprep.subr.bf16.mxu0 0
      %1348 = vmatpush1.bf16.msra.mxu0 0
      %1349 = vmatprep.subr.bf16.mxu0 0
      %1350 = vmatpush1.bf16.msra.mxu0 0
      %1351 = vmatprep.subr.bf16.mxu0 0
      %1352 = vmatpush1.bf16.msra.mxu0 0
      %1353 = vmatprep.subr.bf16.mxu0 0
      %1354 = vmatpush1.bf16.msra.mxu0 0
      %1355 = vmatprep.subr.bf16.mxu0 0
      %1356 = vmatpush1.bf16.msra.mxu0 0
      %1357 = vmatprep.subr.bf16.mxu0 0
      %1358 = vmatpush1.bf16.msra.mxu0 0
      %1359 = vmatprep.mubr.bf16.mxu0 0
      %1360 = vmatmul.mubr.bf16.gmra.mrb[0].mxu0 %v1260
      %v1361 = vpop.f32.mrb[0].mxu0
      %v1362 = vadd.f32 0.0, %v1361
      %v1363 = vpop.f32.mrb[0].mxu0
      %v1364 = vpop.f32.mrb[0].mxu0
      %v1365 = vadd.f32 0.0, %v1364
      %v1366 = vpop.f32.mrb[0].mxu0
      %1367 = vmatprep.mubr.bf16.mxu0 0
      %1368 = vmatmul.mubr.bf16.gmra.mrb[0].mxu0 %v1263
      %v1369 = vpop.f32.mrb[0].mxu0
      %v1370 = vadd.f32 0.0, %v1369
      %v1371 = vpop.f32.mrb[0].mxu0
      %v1372 = vpop.f32.mrb[0].mxu0
      %v1373 = vadd.f32 0.0, %v1372
      %v1374 = vpop.f32.mrb[0].mxu0
      %1375 = vdwg.mxu0
      %v1376 = vadd.f32 %v1198, %v1309
      %v1377 = vadd.f32 %v1199, %v1311
      %v1378 = vadd.f32 %v1200, %v1362
      %v1379 = vadd.f32 %v1201, %v1313
      %v1380 = vadd.f32 %v1202, %v1315
      %v1381 = vadd.f32 %v1203, %v1365
      %v1382 = vadd.f32 %v1204, %v1319
      %v1383 = vadd.f32 %v1205, %v1321
      %v1384 = vadd.f32 %v1206, %v1370
      %v1385 = vadd.f32 %v1207, %v1323
      %v1386 = vadd.f32 %v1208, %v1325
      %v1387 = vadd.f32 %v1209, %v1373
      %v1388 = vld [vmem:[%s183] sm:$0xff]
      %v1389 = vld [vmem:[%s1] sm:$0xf]
      %v1390 = vld [vmem:[%s1 + $0x4] sm:$0xf]
      %v1391 = vld [vmem:[%s1 + $0x8] sm:$0xf]
      %v1392 = vld [vmem:[%s1 + $0xc] sm:$0xf]
      %v1397 = vunpack.c.l.b16 %v1389
      %v1398 = vunpack.c.l.b16 %v1390
      %v1399 = vunpack.c.l.b16 %v1391
      %v1400 = vunpack.c.l.b16 %v1392
      %v1401 = vpack.c.b16 %v1398, %v1397
      %v1402 = vpack.c.b16 %v1400, %v1399
      %1403 = vrot.lane.b32.xlu0 %v1401, 100
      %v1404 = vpop.permute.xlu0 %1403
      %1405 = vrot.lane.b32.xlu0 %v1402, 100
      %v1406 = vpop.permute.xlu0 %1405
      %v1408 = vcombine.high %v1388, %v1388
      %v1410 = vunpack.c.l.s4 1983009808
      %v1411 = vunpack.c.0.s8 %v1410
      %v1412 = vlaneseq
      %v1413 = vshrl.u32 %v1412, 7
      %v1414 = vsub.s32 %v1411, %v1413
      %v1415 = vrot.slane %v1388, %v1414
      %v1417 = vunpack.c.l.s4 1983009808
      %v1418 = vunpack.c.0.s8 %v1417
      %v1419 = vlaneseq
      %v1420 = vshrl.u32 %v1419, 7
      %v1421 = vsub.s32 %v1418, %v1420
      %v1422 = vrot.slane %v1408, %v1421
      %v1423 = vcombine.high %v1415, %v1415
      %v1424 = vcombine.high %v1422, %v1422
      %1425 = vrot.lane.b32.xlu0 %v1415, 91
      %v1426 = vpop.permute.xlu0 %1425
      %1427 = vrot.lane.b32.xlu0 %v1423, 91
      %v1428 = vpop.permute.xlu0 %1427
      %1429 = vrot.lane.b32.xlu0 %v1422, 91
      %v1430 = vpop.permute.xlu0 %1429
      %1431 = vrot.lane.b32.xlu0 %v1424, 91
      %v1432 = vpop.permute.xlu0 %1431
      %vm1433 = vcmask 744448
      %v1434 = vsel %vm1433, %v1426, %v1428
      %v1435 = vsel %vm1433, %v1428, %v1430
      %v1436 = vsel %vm1433, %v1430, %v1432
      %v1438 = vsel %vm245, %v1404, 0
      %v1441 = vsel %vm245, %v1406, 0
      %v1444 = vsel %vm252, %v1434, 0
      %v1447 = vsel %vm252, %v1435, 0
      %v1450 = vsel %vm252, %v1436, 0
      %1452 = vmatprep.subr.bf16.mxu0 %v1447
      %1453 = vmatpush1.bf16.msra.mxu0 %v1444
      %1454 = vmatprep.subr.bf16.mxu0 0
      %1455 = vmatpush1.bf16.msra.mxu0 0
      %1456 = vmatprep.subr.bf16.mxu0 0
      %1457 = vmatpush1.bf16.msra.mxu0 0
      %1458 = vmatprep.subr.bf16.mxu0 0
      %1459 = vmatpush1.bf16.msra.mxu0 0
      %1460 = vmatprep.subr.bf16.mxu0 0
      %1461 = vmatpush1.bf16.msra.mxu0 0
      %1462 = vmatprep.subr.bf16.mxu0 0
      %1463 = vmatpush1.bf16.msra.mxu0 0
      %1464 = vmatprep.subr.bf16.mxu0 0
      %1465 = vmatpush1.bf16.msra.mxu0 0
      %1466 = vmatprep.subr.bf16.mxu0 0
      %1467 = vmatpush1.bf16.msra.mxu0 0
      %1468 = vmatprep.subr.bf16.mxu0 0
      %1469 = vmatpush1.bf16.msra.mxu0 0
      %1470 = vmatprep.subr.bf16.mxu0 0
      %1471 = vmatpush1.bf16.msra.mxu0 0
      %1472 = vmatprep.subr.bf16.mxu0 0
      %1473 = vmatpush1.bf16.msra.mxu0 0
      %1474 = vmatprep.subr.bf16.mxu0 0
      %1475 = vmatpush1.bf16.msra.mxu0 0
      %1476 = vmatprep.subr.bf16.mxu0 0
      %1477 = vmatpush1.bf16.msra.mxu0 0
      %1478 = vmatprep.subr.bf16.mxu0 0
      %1479 = vmatpush1.bf16.msra.mxu0 0
      %1480 = vmatprep.subr.bf16.mxu0 0
      %1481 = vmatpush1.bf16.msra.mxu0 0
      %1482 = vmatprep.subr.bf16.mxu0 0
      %1483 = vmatpush1.bf16.msra.mxu0 0
      %1484 = vmatprep.mubr.bf16.mxu0 0
      %1485 = vmatmul.mubr.bf16.gmra.mrb[0].mxu0 %v1438
      %v1486 = vpop.f32.mrb[0].mxu0
      %v1487 = vadd.f32 0.0, %v1486
      %v1488 = vpop.f32.mrb[0].mxu0
      %v1489 = vadd.f32 0.0, %v1488
      %v1490 = vpop.f32.mrb[0].mxu0
      %v1491 = vadd.f32 0.0, %v1490
      %v1492 = vpop.f32.mrb[0].mxu0
      %v1493 = vadd.f32 0.0, %v1492
      %1494 = vmatprep.mubr.bf16.mxu0 0
      %1495 = vmatmul.mubr.bf16.gmra.mrb[0].mxu0 %v1441
      %v1496 = vpop.f32.mrb[0].mxu0
      %v1497 = vadd.f32 0.0, %v1496
      %v1498 = vpop.f32.mrb[0].mxu0
      %v1499 = vadd.f32 0.0, %v1498
      %v1500 = vpop.f32.mrb[0].mxu0
      %v1501 = vadd.f32 0.0, %v1500
      %v1502 = vpop.f32.mrb[0].mxu0
      %v1503 = vadd.f32 0.0, %v1502
      %1504 = vdwg.mxu0
      %1505 = vmatprep.subr.bf16.mxu0 0
      %1506 = vmatpush1.bf16.msra.mxu0 %v1450
      %1507 = vmatprep.subr.bf16.mxu0 0
      %1508 = vmatpush1.bf16.msra.mxu0 0
      %1509 = vmatprep.subr.bf16.mxu0 0
      %1510 = vmatpush1.bf16.msra.mxu0 0
      %1511 = vmatprep.subr.bf16.mxu0 0
      %1512 = vmatpush1.bf16.msra.mxu0 0
      %1513 = vmatprep.subr.bf16.mxu0 0
      %1514 = vmatpush1.bf16.msra.mxu0 0
      %1515 = vmatprep.subr.bf16.mxu0 0
      %1516 = vmatpush1.bf16.msra.mxu0 0
      %1517 = vmatprep.subr.bf16.mxu0 0
      %1518 = vmatpush1.bf16.msra.mxu0 0
      %1519 = vmatprep.subr.bf16.mxu0 0
      %1520 = vmatpush1.bf16.msra.mxu0 0
      %1521 = vmatprep.subr.bf16.mxu0 0
      %1522 = vmatpush1.bf16.msra.mxu0 0
      %1523 = vmatprep.subr.bf16.mxu0 0
      %1524 = vmatpush1.bf16.msra.mxu0 0
      %1525 = vmatprep.subr.bf16.mxu0 0
      %1526 = vmatpush1.bf16.msra.mxu0 0
      %1527 = vmatprep.subr.bf16.mxu0 0
      %1528 = vmatpush1.bf16.msra.mxu0 0
      %1529 = vmatprep.subr.bf16.mxu0 0
      %1530 = vmatpush1.bf16.msra.mxu0 0
      %1531 = vmatprep.subr.bf16.mxu0 0
      %1532 = vmatpush1.bf16.msra.mxu0 0
      %1533 = vmatprep.subr.bf16.mxu0 0
      %1534 = vmatpush1.bf16.msra.mxu0 0
      %1535 = vmatprep.subr.bf16.mxu0 0
      %1536 = vmatpush1.bf16.msra.mxu0 0
      %1537 = vmatprep.mubr.bf16.mxu0 0
      %1538 = vmatmul.mubr.bf16.gmra.mrb[0].mxu0 %v1438
      %v1539 = vpop.f32.mrb[0].mxu0
      %v1540 = vadd.f32 0.0, %v1539
      %v1541 = vpop.f32.mrb[0].mxu0
      %v1542 = vpop.f32.mrb[0].mxu0
      %v1543 = vadd.f32 0.0, %v1542
      %v1544 = vpop.f32.mrb[0].mxu0
      %1545 = vmatprep.mubr.bf16.mxu0 0
      %1546 = vmatmul.mubr.bf16.gmra.mrb[0].mxu0 %v1441
      %v1547 = vpop.f32.mrb[0].mxu0
      %v1548 = vadd.f32 0.0, %v1547
      %v1549 = vpop.f32.mrb[0].mxu0
      %v1550 = vpop.f32.mrb[0].mxu0
      %v1551 = vadd.f32 0.0, %v1550
      %v1552 = vpop.f32.mrb[0].mxu0
      %1553 = vdwg.mxu0
      %v1554 = vadd.f32 %v1376, %v1487
      %v1555 = vadd.f32 %v1377, %v1489
      %v1556 = vadd.f32 %v1378, %v1540
      %v1557 = vadd.f32 %v1379, %v1491
      %v1558 = vadd.f32 %v1380, %v1493
      %v1559 = vadd.f32 %v1381, %v1543
      %v1560 = vadd.f32 %v1382, %v1497
      %v1561 = vadd.f32 %v1383, %v1499
      %v1562 = vadd.f32 %v1384, %v1548
      %v1563 = vadd.f32 %v1385, %v1501
      %v1564 = vadd.f32 %v1386, %v1503
      %v1565 = vadd.f32 %v1387, %v1551
      %v1566 = vld [vmem:[%s183] sm:$0xff]
      %v1567 = vld [vmem:[%s1] sm:$0xf]
      %v1568 = vld [vmem:[%s1 + $0x4] sm:$0xf]
      %v1569 = vld [vmem:[%s1 + $0x8] sm:$0xf]
      %v1570 = vld [vmem:[%s1 + $0xc] sm:$0xf]
      %v1575 = vunpack.c.l.b16 %v1567
      %v1576 = vunpack.c.l.b16 %v1568
      %v1577 = vunpack.c.l.b16 %v1569
      %v1578 = vunpack.c.l.b16 %v1570
      %v1579 = vpack.c.b16 %v1576, %v1575
      %v1580 = vpack.c.b16 %v1578, %v1577
      %1581 = vrot.lane.b32.xlu0 %v1579, 96
      %v1582 = vpop.permute.xlu0 %1581
      %1583 = vrot.lane.b32.xlu0 %v1580, 96
      %v1584 = vpop.permute.xlu0 %1583
      %v1586 = vcombine.high %v1566, %v1566
      %v1588 = vunpack.c.l.s4 1983009808
      %v1589 = vunpack.c.0.s8 %v1588
      %v1590 = vlaneseq
      %v1591 = vshrl.u32 %v1590, 7
      %v1592 = vsub.s32 %v1589, %v1591
      %v1593 = vrot.slane %v1566, %v1592
      %v1595 = vunpack.c.l.s4 1983009808
      %v1596 = vunpack.c.0.s8 %v1595
      %v1597 = vlaneseq
      %v1598 = vshrl.u32 %v1597, 7
      %v1599 = vsub.s32 %v1596, %v1598
      %v1600 = vrot.slane %v1586, %v1599
      %v1601 = vcombine.high %v1593, %v1593
      %v1602 = vcombine.high %v1600, %v1600
      %1603 = vrot.lane.b32.xlu0 %v1593, 90
      %v1604 = vpop.permute.xlu0 %1603
      %1605 = vrot.lane.b32.xlu0 %v1601, 90
      %v1606 = vpop.permute.xlu0 %1605
      %1607 = vrot.lane.b32.xlu0 %v1600, 90
      %v1608 = vpop.permute.xlu0 %1607
      %1609 = vrot.lane.b32.xlu0 %v1602, 90
      %v1610 = vpop.permute.xlu0 %1609
      %vm1611 = vcmask 736256
      %v1612 = vsel %vm1611, %v1604, %v1606
      %v1613 = vsel %vm1611, %v1606, %v1608
      %v1614 = vsel %vm1611, %v1608, %v1610
      %v1616 = vsel %vm245, %v1582, 0
      %v1619 = vsel %vm245, %v1584, 0
      %v1622 = vsel %vm252, %v1612, 0
      %v1625 = vsel %vm252, %v1613, 0
      %v1628 = vsel %vm252, %v1614, 0
      %1630 = vmatprep.subr.bf16.mxu0 %v1625
      %1631 = vmatpush1.bf16.msra.mxu0 %v1622
      %1632 = vmatprep.subr.bf16.mxu0 0
      %1633 = vmatpush1.bf16.msra.mxu0 0
      %1634 = vmatprep.subr.bf16.mxu0 0
      %1635 = vmatpush1.bf16.msra.mxu0 0
      %1636 = vmatprep.subr.bf16.mxu0 0
      %1637 = vmatpush1.bf16.msra.mxu0 0
      %1638 = vmatprep.subr.bf16.mxu0 0
      %1639 = vmatpush1.bf16.msra.mxu0 0
      %1640 = vmatprep.subr.bf16.mxu0 0
      %1641 = vmatpush1.bf16.msra.mxu0 0
      %1642 = vmatprep.subr.bf16.mxu0 0
      %1643 = vmatpush1.bf16.msra.mxu0 0
      %1644 = vmatprep.subr.bf16.mxu0 0
      %1645 = vmatpush1.bf16.msra.mxu0 0
      %1646 = vmatprep.subr.bf16.mxu0 0
      %1647 = vmatpush1.bf16.msra.mxu0 0
      %1648 = vmatprep.subr.bf16.mxu0 0
      %1649 = vmatpush1.bf16.msra.mxu0 0
      %1650 = vmatprep.subr.bf16.mxu0 0
      %1651 = vmatpush1.bf16.msra.mxu0 0
      %1652 = vmatprep.subr.bf16.mxu0 0
      %1653 = vmatpush1.bf16.msra.mxu0 0
      %1654 = vmatprep.subr.bf16.mxu0 0
      %1655 = vmatpush1.bf16.msra.mxu0 0
      %1656 = vmatprep.subr.bf16.mxu0 0
      %1657 = vmatpush1.bf16.msra.mxu0 0
      %1658 = vmatprep.subr.bf16.mxu0 0
      %1659 = vmatpush1.bf16.msra.mxu0 0
      %1660 = vmatprep.subr.bf16.mxu0 0
      %1661 = vmatpush1.bf16.msra.mxu0 0
      %1662 = vmatprep.mubr.bf16.mxu0 0
      %1663 = vmatmul.mubr.bf16.gmra.mrb[0].mxu0 %v1616
      %v1664 = vpop.f32.mrb[0].mxu0
      %v1665 = vadd.f32 0.0, %v1664
      %v1666 = vpop.f32.mrb[0].mxu0
      %v1667 = vadd.f32 0.0, %v1666
      %v1668 = vpop.f32.mrb[0].mxu0
      %v1669 = vadd.f32 0.0, %v1668
      %v1670 = vpop.f32.mrb[0].mxu0
      %v1671 = vadd.f32 0.0, %v1670
      %1672 = vmatprep.mubr.bf16.mxu0 0
      %1673 = vmatmul.mubr.bf16.gmra.mrb[0].mxu0 %v1619
      %v1674 = vpop.f32.mrb[0].mxu0
      %v1675 = vadd.f32 0.0, %v1674
      %v1676 = vpop.f32.mrb[0].mxu0
      %v1677 = vadd.f32 0.0, %v1676
      %v1678 = vpop.f32.mrb[0].mxu0
      %v1679 = vadd.f32 0.0, %v1678
      %v1680 = vpop.f32.mrb[0].mxu0
      %v1681 = vadd.f32 0.0, %v1680
      %1682 = vdwg.mxu0
      %1683 = vmatprep.subr.bf16.mxu0 0
      %1684 = vmatpush1.bf16.msra.mxu0 %v1628
      %1685 = vmatprep.subr.bf16.mxu0 0
      %1686 = vmatpush1.bf16.msra.mxu0 0
      %1687 = vmatprep.subr.bf16.mxu0 0
      %1688 = vmatpush1.bf16.msra.mxu0 0
      %1689 = vmatprep.subr.bf16.mxu0 0
      %1690 = vmatpush1.bf16.msra.mxu0 0
      %1691 = vmatprep.subr.bf16.mxu0 0
      %1692 = vmatpush1.bf16.msra.mxu0 0
      %1693 = vmatprep.subr.bf16.mxu0 0
      %1694 = vmatpush1.bf16.msra.mxu0 0
      %1695 = vmatprep.subr.bf16.mxu0 0
      %1696 = vmatpush1.bf16.msra.mxu0 0
      %1697 = vmatprep.subr.bf16.mxu0 0
      %1698 = vmatpush1.bf16.msra.mxu0 0
      %1699 = vmatprep.subr.bf16.mxu0 0
      %1700 = vmatpush1.bf16.msra.mxu0 0
      %1701 = vmatprep.subr.bf16.mxu0 0
      %1702 = vmatpush1.bf16.msra.mxu0 0
      %1703 = vmatprep.subr.bf16.mxu0 0
      %1704 = vmatpush1.bf16.msra.mxu0 0
      %1705 = vmatprep.subr.bf16.mxu0 0
      %1706 = vmatpush1.bf16.msra.mxu0 0
      %1707 = vmatprep.subr.bf16.mxu0 0
      %1708 = vmatpush1.bf16.msra.mxu0 0
      %1709 = vmatprep.subr.bf16.mxu0 0
      %1710 = vmatpush1.bf16.msra.mxu0 0
      %1711 = vmatprep.subr.bf16.mxu0 0
      %1712 = vmatpush1.bf16.msra.mxu0 0
      %1713 = vmatprep.subr.bf16.mxu0 0
      %1714 = vmatpush1.bf16.msra.mxu0 0
      %1715 = vmatprep.mubr.bf16.mxu0 0
      %1716 = vmatmul.mubr.bf16.gmra.mrb[0].mxu0 %v1616
      %v1717 = vpop.f32.mrb[0].mxu0
      %v1718 = vadd.f32 0.0, %v1717
      %v1719 = vpop.f32.mrb[0].mxu0
      %v1720 = vpop.f32.mrb[0].mxu0
      %v1721 = vadd.f32 0.0, %v1720
      %v1722 = vpop.f32.mrb[0].mxu0
      %1723 = vmatprep.mubr.bf16.mxu0 0
      %1724 = vmatmul.mubr.bf16.gmra.mrb[0].mxu0 %v1619
      %v1725 = vpop.f32.mrb[0].mxu0
      %v1726 = vadd.f32 0.0, %v1725
      %v1727 = vpop.f32.mrb[0].mxu0
      %v1728 = vpop.f32.mrb[0].mxu0
      %v1729 = vadd.f32 0.0, %v1728
      %v1730 = vpop.f32.mrb[0].mxu0
      %1731 = vdwg.mxu0
      %v1732 = vadd.f32 %v1554, %v1665
      %v1733 = vadd.f32 %v1555, %v1667
      %v1734 = vadd.f32 %v1556, %v1718
      %v1735 = vadd.f32 %v1557, %v1669
      %v1736 = vadd.f32 %v1558, %v1671
      %v1737 = vadd.f32 %v1559, %v1721
      %v1738 = vadd.f32 %v1560, %v1675
      %v1739 = vadd.f32 %v1561, %v1677
      %v1740 = vadd.f32 %v1562, %v1726
      %v1741 = vadd.f32 %v1563, %v1679
      %v1742 = vadd.f32 %v1564, %v1681
      %v1743 = vadd.f32 %v1565, %v1729
      %v1744 = vld [vmem:[%s2] sm:$0xff]
      %v1745 = vld [vmem:[%s2 + $0x8] sm:$0xff]
      %v1746 = vld [vmem:[%s2 + $0x10] sm:$0xff]
      %v1747 = vld [vmem:[%s2 + $0x18] sm:$0xff]
      %1749 = vset.pattern.permute.xlu0 0
      %1750 = vperm.xlu0 %1749, %v1744
      %v1751 = vpop.permute.xlu0 %1750
      %1754 = vset.pattern.permute.xlu0 0
      %1755 = vperm.xlu0 %1754, %v1745
      %v1756 = vpop.permute.xlu0 %1755
      %1759 = vset.pattern.permute.xlu0 0
      %1760 = vperm.xlu0 %1759, %v1746
      %v1761 = vpop.permute.xlu0 %1760
      %1764 = vset.pattern.permute.xlu0 0
      %1765 = vperm.xlu0 %1764, %v1747
      %v1766 = vpop.permute.xlu0 %1765
      %v1768 = vadd.f32 %v1732, %v1751
      %v1769 = vadd.f32 %v1733, %v1751
      %v1770 = vadd.f32 %v1734, %v1751
      %v1771 = vadd.f32 %v1735, %v1756
      %v1772 = vadd.f32 %v1736, %v1756
      %v1773 = vadd.f32 %v1737, %v1756
      %v1774 = vadd.f32 %v1738, %v1761
      %v1775 = vadd.f32 %v1739, %v1761
      %v1776 = vadd.f32 %v1740, %v1761
      %v1777 = vadd.f32 %v1741, %v1766
      %v1778 = vadd.f32 %v1742, %v1766
      %v1779 = vadd.f32 %v1743, %v1766
      %v1780 = vmax.f32 %v1768, 0.0
      %v1781 = vmax.f32 %v1769, 0.0
      %v1782 = vmax.f32 %v1770, 0.0
      %v1783 = vmax.f32 %v1771, 0.0
      %v1784 = vmax.f32 %v1772, 0.0
      %v1785 = vmax.f32 %v1773, 0.0
      %v1786 = vmax.f32 %v1774, 0.0
      %v1787 = vmax.f32 %v1775, 0.0
      %v1788 = vmax.f32 %v1776, 0.0
      %v1789 = vmax.f32 %v1777, 0.0
      %v1790 = vmax.f32 %v1778, 0.0
      %v1791 = vmax.f32 %v1779, 0.0
      %v1792 = vpack.c.bf16 %v1783, %v1780
      %v1793 = vpack.c.bf16 %v1784, %v1781
      %v1794 = vpack.c.bf16 %v1785, %v1782
      %v1795 = vpack.c.bf16 %v1789, %v1786
      %v1796 = vpack.c.bf16 %v1790, %v1787
      %v1797 = vpack.c.bf16 %v1791, %v1788
      %v1804 = vunpack.c.l.b16 %v1792
      %v1805 = vunpack.c.l.b16 %v1793
      %v1806 = vunpack.c.l.b16 %v1794
      %v1807 = vunpack.c.h.b16 %v1792
      %v1808 = vunpack.c.h.b16 %v1793
      %v1809 = vunpack.c.h.b16 %v1794
      %v1810 = vunpack.c.l.b16 %v1795
      %v1811 = vunpack.c.l.b16 %v1796
      %v1812 = vunpack.c.l.b16 %v1797
      %v1813 = vunpack.c.h.b16 %v1795
      %v1814 = vunpack.c.h.b16 %v1796
      %v1815 = vunpack.c.h.b16 %v1797
      %v1816 = vpack.c.b16 %v1805, %v1804
      %v1817 = vpack.c.b16 %v1806, %v1806
      %v1818 = vpack.c.b16 %v1808, %v1807
      %v1819 = vpack.c.b16 %v1809, %v1809
      %v1820 = vpack.c.b16 %v1811, %v1810
      %v1821 = vpack.c.b16 %v1812, %v1812
      %v1822 = vpack.c.b16 %v1814, %v1813
      %v1823 = vpack.c.b16 %v1815, %v1815
      %1832 = vst [vmem:[%s192] sm:$0xff] %v1816
      %1833 = vst [vmem:[%s192 + $0x8] sm:$0xf] %v1817
      %1834 = vst [vmem:[%s192 + $0xc] sm:$0xff] %v1818
      %1835 = vst [vmem:[%s192 + $0x14] sm:$0xf] %v1819
      %1836 = vst [vmem:[%s192 + $0x18] sm:$0xff] %v1820
      %1837 = vst [vmem:[%s192 + $0x20] sm:$0xf] %v1821
      %1838 = vst [vmem:[%s192 + $0x24] sm:$0xff] %v1822
      %1839 = vst [vmem:[%s192 + $0x2c] sm:$0xf] %v1823
      %s1840 = smul.u32 3, %s19
      %p1841 = scmp.lt.s32.totalorder %s18, 1
      %s1842 = scalar_select %p1841, %s18, 1
      %p1843 = scmp.lt.s32.totalorder %s1840, 2
      %s1844 = scalar_select %p1843, %s1840, 2
      %s1845 = smul.addr %s1842, 12
      %s1846 = sadd.s32 %s1844, %s1845
      %s1847 = smul.addr %s1846, 4
      %s1848 = scalar_lea.vmem %s3, %s1847
      // Predicated region
      $region33: #{deconv_block.1} parent=31 // pred_check
        %p1849 = pneg %p114
      $region34: #{deconv_block.1} parent=31 // pred_check_branch
        %1851 = sbr.rel (%p1849) target = $region36
      $region35: #{deconv_block.1} parent=31 // pred_region
        %s1852 = smul.u32 3, %s19
      $region36: #{deconv_block.1} parent=31 // pred_fallthru
        _
    $region32: #{deconv_block.1} parent=5 // pred_fallthru
      _
    %p1853 = scmp.le.s32.totalorder 2, %s9
    // Predicated region
    $region37: #{deconv_block.1} parent=5 // pred_check
      %p1854 = pneg %p1853
    $region38: #{deconv_block.1} parent=5 // pred_check_branch
      %1856 = sbr.rel (%p1854) target = $region40
    $region39: #{deconv_block.1} parent=5 // pred_region
      %s1857 = ssub.s32 %s9, 2
      // Predicated region
      $region41: #{deconv_block.1} parent=39 // pred_check
        %p1858 = pneg %p120
      $region42: #{deconv_block.1} parent=39 // pred_check_branch
        %1860 = sbr.rel (%p1858) target = $region44
      $region43: #{deconv_block.1} parent=39 // pred_region
        %s1861 = smul.u32 3, %s21
        %p1862 = scmp.lt.s32.totalorder %s20, 1
        %s1863 = scalar_select %p1862, %s20, 1
        %p1864 = scmp.lt.s32.totalorder %s1861, 2
        %s1865 = scalar_select %p1864, %s1861, 2
        %s1866 = smul.addr %s1863, 12
        %s1867 = sadd.s32 %s1865, %s1866
        %s1868 = smul.addr %s1867, 4
        %s1869 = scalar_lea.vmem %s3, %s1868
      $region44: #{deconv_block.1} parent=39 // pred_fallthru
        _
    $region40: #{deconv_block.1} parent=5 // pred_fallthru
      _
  $region6: #{deconv_block.1} parent=0 // loop_footer
    %s13 = sadd.s32 1, %s9
  $region7: #{deconv_block.1} parent=0 // loop_footer_branch
    %8 = sbr.rel target = $region3
  $region8: #{deconv_block.1} parent=0 // loop_exit
    _

</llo_original>
